<compile_context>
chip_gen: v5e
topology: v5e:2x2
jax: 0.10.0
libtpu: 0.0.40
codegen_flags: <defaults>
</compile_context>

<pallas_src>
import functools
import math

import jax
import jax.numpy as jnp
from jax.experimental import pallas as pl
from jax.experimental.pallas import tpu as pltpu

_GELU_C = math.sqrt(2.0 / math.pi)


def _gelu_tanh(v):
    # TODO(synk): PyTorch nn.GELU defaults to the exact erf form; the tanh approximation
    # is used (max abs deviation ~1e-3) since erf is not a guaranteed Mosaic lowering.
    return 0.5 * v * (1.0 + jnp.tanh(_GELU_C * (v + 0.044715 * v * v * v)))


def _layer_norm(v, g, b, eps):
    mu = jnp.mean(v, axis=-1, keepdims=True)
    cent = v - mu
    var = jnp.mean(cent * cent, axis=-1, keepdims=True)
    return cent * jax.lax.rsqrt(var + eps) * g + b


def encoder_kernel(x_ref, ln1g_ref, ln1b_ref, wqkv_ref, wproj_ref, bproj_ref,
                   ln2g_ref, ln2b_ref, w1_ref, b1_ref, w2_ref, b2_ref,
                   lnfg_ref, lnfb_ref, o_ref, *, num_heads, eps):
    d = pl.program_id(1)
    n_layers = pl.num_programs(1)
    H = num_heads
    f32, bf16 = jnp.float32, jnp.bfloat16

    # Depth step 0: load the input into the VMEM-resident output block (residual stream).
    @pl.when(d == 0)
    def _():
        o_ref[...] = x_ref[...]

    x = o_ref[...]                                   # (Bt, N, C) f32 residual stream
    Bt, N, C = x.shape
    hd = C // H

    # ---------------- Attention sub-layer ----------------
    h1 = _layer_norm(x, ln1g_ref[0], ln1b_ref[0], eps)
    h1f = h1.reshape(Bt * N, C).astype(bf16)
    # Single fused QKV GEMM; the attention scale is already folded into the q columns.
    qkv = jnp.dot(h1f, wqkv_ref[0], preferred_element_type=f32)      # (Bt*N, 3C)
    qkv = qkv.reshape(Bt, N, 3 * C)

    # Per-head scores / softmax / PV (static unroll over heads; batch tile is the
    # single einsum batch dim -> native Mosaic dot_general, no transposes).
    # TODO(synk): switch to a query-tiled online-softmax formulation at real N.
    head_outs = []
    for h in range(H):
        qh = qkv[:, :, 0 * C + h * hd: 0 * C + (h + 1) * hd].astype(bf16)  # (Bt, N, hd)
        kh = qkv[:, :, 1 * C + h * hd: 1 * C + (h + 1) * hd].astype(bf16)
        vh = qkv[:, :, 2 * C + h * hd: 2 * C + (h + 1) * hd].astype(bf16)
        s = jnp.einsum("bqd,bkd->bqk", qh, kh, preferred_element_type=f32)
        s = s - jnp.max(s, axis=-1, keepdims=True)
        p = jnp.exp(s)
        p = p * pl.reciprocal(jnp.sum(p, axis=-1, keepdims=True), approx=True)
        # attn_drop is identity (p = 0.0 / eval)
        head_outs.append(jnp.einsum("bqk,bkd->bqd", p.astype(bf16), vh,
                                    preferred_element_type=f32))     # (Bt, N, hd)

    # Head merge = lane concat, then one (Bt*N, C) @ (C, C) projection GEMM.
    attn = jnp.concatenate(head_outs, axis=-1)                       # (Bt, N, C) f32
    attn_f = attn.reshape(Bt * N, C).astype(bf16)
    y = jnp.dot(attn_f, wproj_ref[0], preferred_element_type=f32) + bproj_ref[0]
    x = x + y.reshape(Bt, N, C)

    # ---------------- MLP sub-layer ----------------
    h2 = _layer_norm(x, ln2g_ref[0], ln2b_ref[0], eps)
    h2f = h2.reshape(Bt * N, C).astype(bf16)
    z = jnp.dot(h2f, w1_ref[0], preferred_element_type=f32) + b1_ref[0]
    z = _gelu_tanh(z).astype(bf16)
    y2 = jnp.dot(z, w2_ref[0], preferred_element_type=f32) + b2_ref[0]
    x = x + y2.reshape(Bt, N, C)

    # Carry the residual stream; apply the final LayerNorm on the last block.
    @pl.when(d < n_layers - 1)
    def _():
        o_ref[...] = x.astype(o_ref.dtype)

    @pl.when(d == n_layers - 1)
    def _():
        o_ref[...] = _layer_norm(x, lnfg_ref[...], lnfb_ref[...], eps).astype(o_ref.dtype)


def token_transformer_encoder_forward(x, params, *, num_heads, eps=1e-5, block_b=None):
    B, N, C = x.shape
    H = num_heads
    hd = C // H
    scale = hd ** (-0.5)
    depth = params["w_qkv"].shape[0]
    f32, bf16 = jnp.float32, jnp.bfloat16

    if block_b is None:
        block_b = B                      # amortize per-layer weight DMA over the batch
    assert B % block_b == 0

    # One-time host-side weight prep:
    #   fold the attention scale into the q columns (first C output cols) of w_qkv.
    col_scale = jnp.concatenate(
        [jnp.full((C,), scale, dtype=f32), jnp.ones((2 * C,), dtype=f32)])
    wqkv = (params["w_qkv"].astype(f32) * col_scale).astype(bf16)    # (depth, C, 3C)
    wproj = params["w_proj"].astype(bf16)                            # (depth, C, C)
    w1 = params["w1"].astype(bf16)                                   # (depth, C, Ch)
    w2 = params["w2"].astype(bf16)                                   # (depth, Ch, C)

    vec = lambda p: p[:, None, :].astype(f32)                        # (depth, 1, dim)
    ln1_g, ln1_b = vec(params["ln1_g"]), vec(params["ln1_b"])
    ln2_g, ln2_b = vec(params["ln2_g"]), vec(params["ln2_b"])
    b_proj, b1, b2 = vec(params["b_proj"]), vec(params["b1"]), vec(params["b2"])
    lnf_g = params["lnf_g"].reshape(1, C).astype(f32)
    lnf_b = params["lnf_b"].reshape(1, C).astype(f32)

    def per_layer(arr):
        zeros = (0,) * (arr.ndim - 1)
        return pl.BlockSpec((1,) + tuple(arr.shape[1:]), lambda b, d: (d,) + zeros)

    def shared(arr):
        zeros = (0,) * arr.ndim
        return pl.BlockSpec(tuple(arr.shape), lambda b, d: zeros)

    kernel = functools.partial(encoder_kernel, num_heads=H, eps=eps)

    return pl.pallas_call(
        kernel,
        out_shape=jax.ShapeDtypeStruct((B, N, C), f32),
        grid_spec=pltpu.PrefetchScalarGridSpec(
            num_scalar_prefetch=0,
            grid=(B // block_b, depth),
            in_specs=[
                pl.BlockSpec((block_b, N, C), lambda b, d: (b, 0, 0)),   # x
                per_layer(ln1_g), per_layer(ln1_b),
                per_layer(wqkv), per_layer(wproj), per_layer(b_proj),
                per_layer(ln2_g), per_layer(ln2_b),
                per_layer(w1), per_layer(b1),
                per_layer(w2), per_layer(b2),
                shared(lnf_g), shared(lnf_b),
            ],
            out_specs=pl.BlockSpec((block_b, N, C), lambda b, d: (b, 0, 0)),
        ),
        compiler_params=pltpu.CompilerParams(
            dimension_semantics=("parallel", "arbitrary"),
            vmem_limit_bytes=64 * 1024 * 1024),
    )(x.astype(f32), ln1_g, ln1_b, wqkv, wproj, b_proj,
      ln2_g, ln2_b, w1, b1, w2, b2, lnf_g, lnf_b)


def encoder_reference(x, params, *, num_heads, eps=1e-5):
    """Pure-JAX f32 reference mirroring the PyTorch forward."""
    B, N, C = x.shape
    H = num_heads
    hd = C // H
    scale = hd ** (-0.5)
    depth = params["w_qkv"].shape[0]

    def layer_norm(v, g, b):
        mu = v.mean(-1, keepdims=True)
        var = ((v - mu) ** 2).mean(-1, keepdims=True)
        return (v - mu) / jnp.sqrt(var + eps) * g + b

    for d in range(depth):
        h = layer_norm(x, params["ln1_g"][d], params["ln1_b"][d])
        qkv = h @ params["w_qkv"][d]                                # (B, N, 3C)
        qkv = qkv.reshape(B, N, 3, H, hd).transpose(2, 0, 3, 1, 4)  # (3, B, H, N, hd)
        q, k, v = qkv[0] * scale, qkv[1], qkv[2]
        attn = jax.nn.softmax(jnp.einsum("bhqd,bhkd->bhqk", q, k), axis=-1)
        o = jnp.einsum("bhqk,bhkd->bhqd", attn, v)
        o = o.transpose(0, 2, 1, 3).reshape(B, N, C)
        x = x + o @ params["w_proj"][d] + params["b_proj"][d]
        h2 = layer_norm(x, params["ln2_g"][d], params["ln2_b"][d])
        z = _gelu_tanh(h2 @ params["w1"][d] + params["b1"][d])
        x = x + z @ params["w2"][d] + params["b2"][d]
    return layer_norm(x, params["lnf_g"], params["lnf_b"])


if __name__ == "__main__":
    # Small shapes consistent with the module: B=2, N=8 tokens, embed_dim=32,
    # 4 heads (head_dim=8), depth=2, mlp_ratio=4 -> hidden=128.
    B, N, C = 2, 8, 32
    num_heads = 4
    depth = 2
    Ch = int(C * 4.0)

    key = jax.random.PRNGKey(0)
    keys = jax.random.split(key, 16)
    nrm = lambda k, shape, std: jax.random.normal(k, shape, dtype=jnp.float32) * std

    x = nrm(keys[0], (B, N, C), 1.0)
    # Deterministic synthetic parameters (not a checkpoint load).
    params = dict(
        ln1_g=1.0 + nrm(keys[1], (depth, C), 0.05),
        ln1_b=nrm(keys[2], (depth, C), 0.05),
        w_qkv=nrm(keys[3], (depth, C, 3 * C), C ** -0.5),   # qkv_bias=False
        w_proj=nrm(keys[4], (depth, C, C), C ** -0.5),
        b_proj=nrm(keys[5], (depth, C), 0.02),
        ln2_g=1.0 + nrm(keys[6], (depth, C), 0.05),
        ln2_b=nrm(keys[7], (depth, C), 0.05),
        w1=nrm(keys[8], (depth, C, Ch), C ** -0.5),
        b1=nrm(keys[9], (depth, Ch), 0.02),
        w2=nrm(keys[10], (depth, Ch, C), Ch ** -0.5),
        b2=nrm(keys[11], (depth, C), 0.02),
        lnf_g=1.0 + nrm(keys[12], (C,), 0.05),
        lnf_b=nrm(keys[13], (C,), 0.05),
    )

    out = token_transformer_encoder_forward(x, params, num_heads=num_heads)
    out = jax.block_until_ready(out)

    ref = encoder_reference(x, params, num_heads=num_heads)
    assert out.shape == (B, N, C)
    # bf16 matmul operands + approx reciprocal -> relaxed tolerance vs the f32 reference.
    err = jnp.max(jnp.abs(out - ref))
    assert jnp.allclose(out, ref, atol=5e-2, rtol=5e-2), f"mismatch vs reference: {err}"

    print("KERNEL_OK")
</pallas_src>

<mosaic_0001>
module attributes {stable_mosaic.version = 11 : i64} {
  func.func @encoder_kernel(%arg0: i32, %arg1: i32, %arg2: memref<2x8x32xf32, #tpu.memory_space<vmem>>, %arg3: memref<1x1x32xf32, #tpu.memory_space<vmem>>, %arg4: memref<1x1x32xf32, #tpu.memory_space<vmem>>, %arg5: memref<1x32x96xbf16, #tpu.memory_space<vmem>>, %arg6: memref<1x32x32xbf16, #tpu.memory_space<vmem>>, %arg7: memref<1x1x32xf32, #tpu.memory_space<vmem>>, %arg8: memref<1x1x32xf32, #tpu.memory_space<vmem>>, %arg9: memref<1x1x32xf32, #tpu.memory_space<vmem>>, %arg10: memref<1x32x128xbf16, #tpu.memory_space<vmem>>, %arg11: memref<1x1x128xf32, #tpu.memory_space<vmem>>, %arg12: memref<1x128x32xbf16, #tpu.memory_space<vmem>>, %arg13: memref<1x1x32xf32, #tpu.memory_space<vmem>>, %arg14: memref<1x32xf32, #tpu.memory_space<vmem>>, %arg15: memref<1x32xf32, #tpu.memory_space<vmem>>, %arg16: memref<2x8x32xf32, #tpu.memory_space<vmem>>) attributes {dimension_semantics = [#tpu.dimension_semantics<parallel>, #tpu.dimension_semantics<arbitrary>], iteration_bounds = array<i64: 1, 2>, scalar_prefetch = 0 : i64, scratch_operands = 0 : i64, tpu.core_type = #tpu.core_type<tc>, window_params = [{transform_indices = @transform_0, window_bounds = array<i64: 2, 8, 32>}, {transform_indices = @transform_1, window_bounds = array<i64: 1, 1, 32>}, {transform_indices = @transform_2, window_bounds = array<i64: 1, 1, 32>}, {transform_indices = @transform_3, window_bounds = array<i64: 1, 32, 96>}, {transform_indices = @transform_4, window_bounds = array<i64: 1, 32, 32>}, {transform_indices = @transform_5, window_bounds = array<i64: 1, 1, 32>}, {transform_indices = @transform_6, window_bounds = array<i64: 1, 1, 32>}, {transform_indices = @transform_7, window_bounds = array<i64: 1, 1, 32>}, {transform_indices = @transform_8, window_bounds = array<i64: 1, 32, 128>}, {transform_indices = @transform_9, window_bounds = array<i64: 1, 1, 128>}, {transform_indices = @transform_10, window_bounds = array<i64: 1, 128, 32>}, {transform_indices = @transform_11, window_bounds = array<i64: 1, 1, 32>}, {pipeline_mode = #tpu.pipeline_mode<synchronous>, transform_indices = @transform_12, window_bounds = array<i64: 1, 32>}, {pipeline_mode = #tpu.pipeline_mode<synchronous>, transform_indices = @transform_13, window_bounds = array<i64: 1, 32>}, {transform_indices = @transform_14, window_bounds = array<i64: 2, 8, 32>}]} {
    %c0_i32 = arith.constant 0 : i32
    %0 = arith.cmpi eq, %arg1, %c0_i32 : i32
    %1 = arith.extui %0 : i1 to i32
    %c0_i32_0 = arith.constant 0 : i32
    %2 = arith.cmpi ne, %1, %c0_i32_0 : i32
    scf.if %2 {
      %c0_72 = arith.constant 0 : index
      %c0_73 = arith.constant 0 : index
      %c0_74 = arith.constant 0 : index
      %188 = vector.load %arg2[%c0_72, %c0_73, %c0_74] : memref<2x8x32xf32, #tpu.memory_space<vmem>>, vector<2x8x32xf32>
      %c0_75 = arith.constant 0 : index
      %c0_76 = arith.constant 0 : index
      %c0_77 = arith.constant 0 : index
      %189 = vector.load %arg16[%c0_75, %c0_76, %c0_77] : memref<2x8x32xf32, #tpu.memory_space<vmem>>, vector<2x8x32xf32>
      tpu.vector_store %arg16[%c0_75, %c0_76, %c0_77], %188 {strides = array<i32>} : memref<2x8x32xf32, #tpu.memory_space<vmem>>, vector<2x8x32xf32>,
    } else {
    }
    %c0 = arith.constant 0 : index
    %c0_1 = arith.constant 0 : index
    %c0_2 = arith.constant 0 : index
    %3 = vector.load %arg16[%c0, %c0_1, %c0_2] : memref<2x8x32xf32, #tpu.memory_space<vmem>>, vector<2x8x32xf32>
    %c0_3 = arith.constant 0 : index
    %c0_4 = arith.constant 0 : index
    %c0_5 = arith.constant 0 : index
    %4 = vector.load %arg3[%c0_3, %c0_4, %c0_5] : memref<1x1x32xf32, #tpu.memory_space<vmem>>, vector<1x1x32xf32>
    %5 = vector.shape_cast %4 : vector<1x1x32xf32> to vector<1x32xf32>
    %c0_6 = arith.constant 0 : index
    %c0_7 = arith.constant 0 : index
    %c0_8 = arith.constant 0 : index
    %6 = vector.load %arg4[%c0_6, %c0_7, %c0_8] : memref<1x1x32xf32, #tpu.memory_space<vmem>>, vector<1x1x32xf32>
    %7 = vector.shape_cast %6 : vector<1x1x32xf32> to vector<1x32xf32>
    %cst = arith.constant dense<0.000000e+00> : vector<2x8xf32>
    %8 = vector.multi_reduction <add>, %3, %cst [2] : vector<2x8x32xf32> to vector<2x8xf32>
    %9 = vector.shape_cast %8 : vector<2x8xf32> to vector<2x8x1xf32>
    %cst_9 = arith.constant 3.200000e+01 : f32
    %10 = vector.broadcast %cst_9 : f32 to vector<2x8x1xf32>
    %11 = arith.divf %9, %10 : vector<2x8x1xf32>
    %12 = vector.broadcast %11 : vector<2x8x1xf32> to vector<2x8x32xf32>
    %13 = arith.subf %3, %12 : vector<2x8x32xf32>
    %14 = arith.mulf %13, %13 : vector<2x8x32xf32>
    %cst_10 = arith.constant dense<0.000000e+00> : vector<2x8xf32>
    %15 = vector.multi_reduction <add>, %14, %cst_10 [2] : vector<2x8x32xf32> to vector<2x8xf32>
    %16 = vector.shape_cast %15 : vector<2x8xf32> to vector<2x8x1xf32>
    %cst_11 = arith.constant 3.200000e+01 : f32
    %17 = vector.broadcast %cst_11 : f32 to vector<2x8x1xf32>
    %18 = arith.divf %16, %17 : vector<2x8x1xf32>
    %cst_12 = arith.constant 9.99999974E-6 : f32
    %19 = vector.broadcast %cst_12 : f32 to vector<2x8x1xf32>
    %20 = arith.addf %18, %19 : vector<2x8x1xf32>
    %21 = math.rsqrt %20 : vector<2x8x1xf32>
    %22 = vector.broadcast %21 : vector<2x8x1xf32> to vector<2x8x32xf32>
    %23 = arith.mulf %13, %22 : vector<2x8x32xf32>
    %24 = vector.shape_cast %5 : vector<1x32xf32> to vector<1x1x32xf32>
    %25 = vector.broadcast %24 : vector<1x1x32xf32> to vector<2x8x32xf32>
    %26 = arith.mulf %23, %25 : vector<2x8x32xf32>
    %27 = vector.shape_cast %7 : vector<1x32xf32> to vector<1x1x32xf32>
    %28 = vector.broadcast %27 : vector<1x1x32xf32> to vector<2x8x32xf32>
    %29 = arith.addf %26, %28 : vector<2x8x32xf32>
    %30 = vector.shape_cast %29 : vector<2x8x32xf32> to vector<16x32xf32>
    %31 = arith.truncf %30 : vector<16x32xf32> to vector<16x32xbf16>
    %c0_13 = arith.constant 0 : index
    %c0_14 = arith.constant 0 : index
    %c0_15 = arith.constant 0 : index
    %32 = vector.load %arg5[%c0_13, %c0_14, %c0_15] : memref<1x32x96xbf16, #tpu.memory_space<vmem>>, vector<1x32x96xbf16>
    %33 = vector.shape_cast %32 : vector<1x32x96xbf16> to vector<32x96xbf16>
    %cst_16 = arith.constant dense<0.000000e+00> : vector<16x96xf32>
    %34 = tpu.matmul %31, %33, %cst_16 {dimension_numbers = #tpu.dot_dimension_numbers<[1], [0], [0], [1], [0, 0, 1, 1], [], []>} : vector<16x32xbf16>, vector<32x96xbf16>, vector<16x96xf32> -> vector<16x96xf32>
    %35 = vector.shape_cast %34 : vector<16x96xf32> to vector<2x8x96xf32>
    %36 = vector.extract_strided_slice %35 {offsets = [0, 0, 0], sizes = [2, 8, 8], strides = [1, 1, 1]} : vector<2x8x96xf32> to vector<2x8x8xf32>
    %37 = arith.truncf %36 : vector<2x8x8xf32> to vector<2x8x8xbf16>
    %38 = vector.extract_strided_slice %35 {offsets = [0, 0, 32], sizes = [2, 8, 8], strides = [1, 1, 1]} : vector<2x8x96xf32> to vector<2x8x8xf32>
    %39 = arith.truncf %38 : vector<2x8x8xf32> to vector<2x8x8xbf16>
    %40 = vector.extract_strided_slice %35 {offsets = [0, 0, 64], sizes = [2, 8, 8], strides = [1, 1, 1]} : vector<2x8x96xf32> to vector<2x8x8xf32>
    %41 = arith.truncf %40 : vector<2x8x8xf32> to vector<2x8x8xbf16>
    "tpu.trace_start"() <{level = 10 : i32, message = "bqd,bkd->bqk"}> : () -> ()
    %cst_17 = arith.constant dense<0.000000e+00> : vector<2x8x8xf32>
    %42 = tpu.matmul %37, %39, %cst_17 {dimension_numbers = #tpu.dot_dimension_numbers<[2], [2], [1], [1], [0, 0, 0, 1, 1, 1], [0], [0]>} : vector<2x8x8xbf16>, vector<2x8x8xbf16>, vector<2x8x8xf32> -> vector<2x8x8xf32>
    "tpu.trace_stop"() : () -> ()
    %cst_18 = arith.constant dense<0xFF800000> : vector<2x8xf32>
    %43 = vector.multi_reduction <maximumf>, %42, %cst_18 [2] : vector<2x8x8xf32> to vector<2x8xf32>
    %44 = vector.shape_cast %43 : vector<2x8xf32> to vector<2x8x1xf32>
    %45 = vector.broadcast %44 : vector<2x8x1xf32> to vector<2x8x8xf32>
    %46 = arith.subf %42, %45 : vector<2x8x8xf32>
    %47 = math.exp %46 : vector<2x8x8xf32>
    %cst_19 = arith.constant dense<0.000000e+00> : vector<2x8xf32>
    %48 = vector.multi_reduction <add>, %47, %cst_19 [2] : vector<2x8x8xf32> to vector<2x8xf32>
    %49 = vector.shape_cast %48 : vector<2x8xf32> to vector<2x8x1xf32>
    %50 = tpu.reciprocal %49 {approx = true} : vector<2x8x1xf32> -> vector<2x8x1xf32>
    %51 = vector.broadcast %50 : vector<2x8x1xf32> to vector<2x8x8xf32>
    %52 = arith.mulf %47, %51 : vector<2x8x8xf32>
    %53 = arith.truncf %52 : vector<2x8x8xf32> to vector<2x8x8xbf16>
    "tpu.trace_start"() <{level = 10 : i32, message = "bqk,bkd->bqd"}> : () -> ()
    %cst_20 = arith.constant dense<0.000000e+00> : vector<2x8x8xf32>
    %54 = tpu.matmul %53, %41, %cst_20 {dimension_numbers = #tpu.dot_dimension_numbers<[2], [1], [1], [2], [0, 0, 0, 1, 1, 2], [0], [0]>} : vector<2x8x8xbf16>, vector<2x8x8xbf16>, vector<2x8x8xf32> -> vector<2x8x8xf32>
    "tpu.trace_stop"() : () -> ()
    %55 = vector.extract_strided_slice %35 {offsets = [0, 0, 8], sizes = [2, 8, 8], strides = [1, 1, 1]} : vector<2x8x96xf32> to vector<2x8x8xf32>
    %56 = arith.truncf %55 : vector<2x8x8xf32> to vector<2x8x8xbf16>
    %57 = vector.extract_strided_slice %35 {offsets = [0, 0, 40], sizes = [2, 8, 8], strides = [1, 1, 1]} : vector<2x8x96xf32> to vector<2x8x8xf32>
    %58 = arith.truncf %57 : vector<2x8x8xf32> to vector<2x8x8xbf16>
    %59 = vector.extract_strided_slice %35 {offsets = [0, 0, 72], sizes = [2, 8, 8], strides = [1, 1, 1]} : vector<2x8x96xf32> to vector<2x8x8xf32>
    %60 = arith.truncf %59 : vector<2x8x8xf32> to vector<2x8x8xbf16>
    "tpu.trace_start"() <{level = 10 : i32, message = "bqd,bkd->bqk"}> : () -> ()
    %cst_21 = arith.constant dense<0.000000e+00> : vector<2x8x8xf32>
    %61 = tpu.matmul %56, %58, %cst_21 {dimension_numbers = #tpu.dot_dimension_numbers<[2], [2], [1], [1], [0, 0, 0, 1, 1, 1], [0], [0]>} : vector<2x8x8xbf16>, vector<2x8x8xbf16>, vector<2x8x8xf32> -> vector<2x8x8xf32>
    "tpu.trace_stop"() : () -> ()
    %cst_22 = arith.constant dense<0xFF800000> : vector<2x8xf32>
    %62 = vector.multi_reduction <maximumf>, %61, %cst_22 [2] : vector<2x8x8xf32> to vector<2x8xf32>
    %63 = vector.shape_cast %62 : vector<2x8xf32> to vector<2x8x1xf32>
    %64 = vector.broadcast %63 : vector<2x8x1xf32> to vector<2x8x8xf32>
    %65 = arith.subf %61, %64 : vector<2x8x8xf32>
    %66 = math.exp %65 : vector<2x8x8xf32>
    %cst_23 = arith.constant dense<0.000000e+00> : vector<2x8xf32>
    %67 = vector.multi_reduction <add>, %66, %cst_23 [2] : vector<2x8x8xf32> to vector<2x8xf32>
    %68 = vector.shape_cast %67 : vector<2x8xf32> to vector<2x8x1xf32>
    %69 = tpu.reciprocal %68 {approx = true} : vector<2x8x1xf32> -> vector<2x8x1xf32>
    %70 = vector.broadcast %69 : vector<2x8x1xf32> to vector<2x8x8xf32>
    %71 = arith.mulf %66, %70 : vector<2x8x8xf32>
    %72 = arith.truncf %71 : vector<2x8x8xf32> to vector<2x8x8xbf16>
    "tpu.trace_start"() <{level = 10 : i32, message = "bqk,bkd->bqd"}> : () -> ()
    %cst_24 = arith.constant dense<0.000000e+00> : vector<2x8x8xf32>
    %73 = tpu.matmul %72, %60, %cst_24 {dimension_numbers = #tpu.dot_dimension_numbers<[2], [1], [1], [2], [0, 0, 0, 1, 1, 2], [0], [0]>} : vector<2x8x8xbf16>, vector<2x8x8xbf16>, vector<2x8x8xf32> -> vector<2x8x8xf32>
    "tpu.trace_stop"() : () -> ()
    %74 = vector.extract_strided_slice %35 {offsets = [0, 0, 16], sizes = [2, 8, 8], strides = [1, 1, 1]} : vector<2x8x96xf32> to vector<2x8x8xf32>
    %75 = arith.truncf %74 : vector<2x8x8xf32> to vector<2x8x8xbf16>
    %76 = vector.extract_strided_slice %35 {offsets = [0, 0, 48], sizes = [2, 8, 8], strides = [1, 1, 1]} : vector<2x8x96xf32> to vector<2x8x8xf32>
    %77 = arith.truncf %76 : vector<2x8x8xf32> to vector<2x8x8xbf16>
    %78 = vector.extract_strided_slice %35 {offsets = [0, 0, 80], sizes = [2, 8, 8], strides = [1, 1, 1]} : vector<2x8x96xf32> to vector<2x8x8xf32>
    %79 = arith.truncf %78 : vector<2x8x8xf32> to vector<2x8x8xbf16>
    "tpu.trace_start"() <{level = 10 : i32, message = "bqd,bkd->bqk"}> : () -> ()
    %cst_25 = arith.constant dense<0.000000e+00> : vector<2x8x8xf32>
    %80 = tpu.matmul %75, %77, %cst_25 {dimension_numbers = #tpu.dot_dimension_numbers<[2], [2], [1], [1], [0, 0, 0, 1, 1, 1], [0], [0]>} : vector<2x8x8xbf16>, vector<2x8x8xbf16>, vector<2x8x8xf32> -> vector<2x8x8xf32>
    "tpu.trace_stop"() : () -> ()
    %cst_26 = arith.constant dense<0xFF800000> : vector<2x8xf32>
    %81 = vector.multi_reduction <maximumf>, %80, %cst_26 [2] : vector<2x8x8xf32> to vector<2x8xf32>
    %82 = vector.shape_cast %81 : vector<2x8xf32> to vector<2x8x1xf32>
    %83 = vector.broadcast %82 : vector<2x8x1xf32> to vector<2x8x8xf32>
    %84 = arith.subf %80, %83 : vector<2x8x8xf32>
    %85 = math.exp %84 : vector<2x8x8xf32>
    %cst_27 = arith.constant dense<0.000000e+00> : vector<2x8xf32>
    %86 = vector.multi_reduction <add>, %85, %cst_27 [2] : vector<2x8x8xf32> to vector<2x8xf32>
    %87 = vector.shape_cast %86 : vector<2x8xf32> to vector<2x8x1xf32>
    %88 = tpu.reciprocal %87 {approx = true} : vector<2x8x1xf32> -> vector<2x8x1xf32>
    %89 = vector.broadcast %88 : vector<2x8x1xf32> to vector<2x8x8xf32>
    %90 = arith.mulf %85, %89 : vector<2x8x8xf32>
    %91 = arith.truncf %90 : vector<2x8x8xf32> to vector<2x8x8xbf16>
    "tpu.trace_start"() <{level = 10 : i32, message = "bqk,bkd->bqd"}> : () -> ()
    %cst_28 = arith.constant dense<0.000000e+00> : vector<2x8x8xf32>
    %92 = tpu.matmul %91, %79, %cst_28 {dimension_numbers = #tpu.dot_dimension_numbers<[2], [1], [1], [2], [0, 0, 0, 1, 1, 2], [0], [0]>} : vector<2x8x8xbf16>, vector<2x8x8xbf16>, vector<2x8x8xf32> -> vector<2x8x8xf32>
    "tpu.trace_stop"() : () -> ()
    %93 = vector.extract_strided_slice %35 {offsets = [0, 0, 24], sizes = [2, 8, 8], strides = [1, 1, 1]} : vector<2x8x96xf32> to vector<2x8x8xf32>
    %94 = arith.truncf %93 : vector<2x8x8xf32> to vector<2x8x8xbf16>
    %95 = vector.extract_strided_slice %35 {offsets = [0, 0, 56], sizes = [2, 8, 8], strides = [1, 1, 1]} : vector<2x8x96xf32> to vector<2x8x8xf32>
    %96 = arith.truncf %95 : vector<2x8x8xf32> to vector<2x8x8xbf16>
    %97 = vector.extract_strided_slice %35 {offsets = [0, 0, 88], sizes = [2, 8, 8], strides = [1, 1, 1]} : vector<2x8x96xf32> to vector<2x8x8xf32>
    %98 = arith.truncf %97 : vector<2x8x8xf32> to vector<2x8x8xbf16>
    "tpu.trace_start"() <{level = 10 : i32, message = "bqd,bkd->bqk"}> : () -> ()
    %cst_29 = arith.constant dense<0.000000e+00> : vector<2x8x8xf32>
    %99 = tpu.matmul %94, %96, %cst_29 {dimension_numbers = #tpu.dot_dimension_numbers<[2], [2], [1], [1], [0, 0, 0, 1, 1, 1], [0], [0]>} : vector<2x8x8xbf16>, vector<2x8x8xbf16>, vector<2x8x8xf32> -> vector<2x8x8xf32>
    "tpu.trace_stop"() : () -> ()
    %cst_30 = arith.constant dense<0xFF800000> : vector<2x8xf32>
    %100 = vector.multi_reduction <maximumf>, %99, %cst_30 [2] : vector<2x8x8xf32> to vector<2x8xf32>
    %101 = vector.shape_cast %100 : vector<2x8xf32> to vector<2x8x1xf32>
    %102 = vector.broadcast %101 : vector<2x8x1xf32> to vector<2x8x8xf32>
    %103 = arith.subf %99, %102 : vector<2x8x8xf32>
    %104 = math.exp %103 : vector<2x8x8xf32>
    %cst_31 = arith.constant dense<0.000000e+00> : vector<2x8xf32>
    %105 = vector.multi_reduction <add>, %104, %cst_31 [2] : vector<2x8x8xf32> to vector<2x8xf32>
    %106 = vector.shape_cast %105 : vector<2x8xf32> to vector<2x8x1xf32>
    %107 = tpu.reciprocal %106 {approx = true} : vector<2x8x1xf32> -> vector<2x8x1xf32>
    %108 = vector.broadcast %107 : vector<2x8x1xf32> to vector<2x8x8xf32>
    %109 = arith.mulf %104, %108 : vector<2x8x8xf32>
    %110 = arith.truncf %109 : vector<2x8x8xf32> to vector<2x8x8xbf16>
    "tpu.trace_start"() <{level = 10 : i32, message = "bqk,bkd->bqd"}> : () -> ()
    %cst_32 = arith.constant dense<0.000000e+00> : vector<2x8x8xf32>
    %111 = tpu.matmul %110, %98, %cst_32 {dimension_numbers = #tpu.dot_dimension_numbers<[2], [1], [1], [2], [0, 0, 0, 1, 1, 2], [0], [0]>} : vector<2x8x8xbf16>, vector<2x8x8xbf16>, vector<2x8x8xf32> -> vector<2x8x8xf32>
    "tpu.trace_stop"() : () -> ()
    %112 = tpu.concatenate %54, %73, %92, %111 in 2 : vector<2x8x8xf32>, vector<2x8x8xf32>, vector<2x8x8xf32>, vector<2x8x8xf32> -> vector<2x8x32xf32>
    %113 = vector.shape_cast %112 : vector<2x8x32xf32> to vector<16x32xf32>
    %114 = arith.truncf %113 : vector<16x32xf32> to vector<16x32xbf16>
    %c0_33 = arith.constant 0 : index
    %c0_34 = arith.constant 0 : index
    %c0_35 = arith.constant 0 : index
    %115 = vector.load %arg6[%c0_33, %c0_34, %c0_35] : memref<1x32x32xbf16, #tpu.memory_space<vmem>>, vector<1x32x32xbf16>
    %116 = vector.shape_cast %115 : vector<1x32x32xbf16> to vector<32x32xbf16>
    %cst_36 = arith.constant dense<0.000000e+00> : vector<16x32xf32>
    %117 = tpu.matmul %114, %116, %cst_36 {dimension_numbers = #tpu.dot_dimension_numbers<[1], [0], [0], [1], [0, 0, 1, 1], [], []>} : vector<16x32xbf16>, vector<32x32xbf16>, vector<16x32xf32> -> vector<16x32xf32>
    %c0_37 = arith.constant 0 : index
    %c0_38 = arith.constant 0 : index
    %c0_39 = arith.constant 0 : index
    %118 = vector.load %arg7[%c0_37, %c0_38, %c0_39] : memref<1x1x32xf32, #tpu.memory_space<vmem>>, vector<1x1x32xf32>
    %119 = vector.shape_cast %118 : vector<1x1x32xf32> to vector<1x32xf32>
    %120 = vector.broadcast %119 : vector<1x32xf32> to vector<16x32xf32>
    %121 = arith.addf %117, %120 : vector<16x32xf32>
    %122 = vector.shape_cast %121 : vector<16x32xf32> to vector<2x8x32xf32>
    %123 = arith.addf %3, %122 : vector<2x8x32xf32>
    %c0_40 = arith.constant 0 : index
    %c0_41 = arith.constant 0 : index
    %c0_42 = arith.constant 0 : index
    %124 = vector.load %arg8[%c0_40, %c0_41, %c0_42] : memref<1x1x32xf32, #tpu.memory_space<vmem>>, vector<1x1x32xf32>
    %125 = vector.shape_cast %124 : vector<1x1x32xf32> to vector<1x32xf32>
    %c0_43 = arith.constant 0 : index
    %c0_44 = arith.constant 0 : index
    %c0_45 = arith.constant 0 : index
    %126 = vector.load %arg9[%c0_43, %c0_44, %c0_45] : memref<1x1x32xf32, #tpu.memory_space<vmem>>, vector<1x1x32xf32>
    %127 = vector.shape_cast %126 : vector<1x1x32xf32> to vector<1x32xf32>
    %cst_46 = arith.constant dense<0.000000e+00> : vector<2x8xf32>
    %128 = vector.multi_reduction <add>, %123, %cst_46 [2] : vector<2x8x32xf32> to vector<2x8xf32>
    %129 = vector.shape_cast %128 : vector<2x8xf32> to vector<2x8x1xf32>
    %cst_47 = arith.constant 3.200000e+01 : f32
    %130 = vector.broadcast %cst_47 : f32 to vector<2x8x1xf32>
    %131 = arith.divf %129, %130 : vector<2x8x1xf32>
    %132 = vector.broadcast %131 : vector<2x8x1xf32> to vector<2x8x32xf32>
    %133 = arith.subf %123, %132 : vector<2x8x32xf32>
    %134 = arith.mulf %133, %133 : vector<2x8x32xf32>
    %cst_48 = arith.constant dense<0.000000e+00> : vector<2x8xf32>
    %135 = vector.multi_reduction <add>, %134, %cst_48 [2] : vector<2x8x32xf32> to vector<2x8xf32>
    %136 = vector.shape_cast %135 : vector<2x8xf32> to vector<2x8x1xf32>
    %cst_49 = arith.constant 3.200000e+01 : f32
    %137 = vector.broadcast %cst_49 : f32 to vector<2x8x1xf32>
    %138 = arith.divf %136, %137 : vector<2x8x1xf32>
    %cst_50 = arith.constant 9.99999974E-6 : f32
    %139 = vector.broadcast %cst_50 : f32 to vector<2x8x1xf32>
    %140 = arith.addf %138, %139 : vector<2x8x1xf32>
    %141 = math.rsqrt %140 : vector<2x8x1xf32>
    %142 = vector.broadcast %141 : vector<2x8x1xf32> to vector<2x8x32xf32>
    %143 = arith.mulf %133, %142 : vector<2x8x32xf32>
    %144 = vector.shape_cast %125 : vector<1x32xf32> to vector<1x1x32xf32>
    %145 = vector.broadcast %144 : vector<1x1x32xf32> to vector<2x8x32xf32>
    %146 = arith.mulf %143, %145 : vector<2x8x32xf32>
    %147 = vector.shape_cast %127 : vector<1x32xf32> to vector<1x1x32xf32>
    %148 = vector.broadcast %147 : vector<1x1x32xf32> to vector<2x8x32xf32>
    %149 = arith.addf %146, %148 : vector<2x8x32xf32>
    %150 = vector.shape_cast %149 : vector<2x8x32xf32> to vector<16x32xf32>
    %151 = arith.truncf %150 : vector<16x32xf32> to vector<16x32xbf16>
    %c0_51 = arith.constant 0 : index
    %c0_52 = arith.constant 0 : index
    %c0_53 = arith.constant 0 : index
    %152 = vector.load %arg10[%c0_51, %c0_52, %c0_53] : memref<1x32x128xbf16, #tpu.memory_space<vmem>>, vector<1x32x128xbf16>
    %153 = vector.shape_cast %152 : vector<1x32x128xbf16> to vector<32x128xbf16>
    %cst_54 = arith.constant dense<0.000000e+00> : vector<16x128xf32>
    %154 = tpu.matmul %151, %153, %cst_54 {dimension_numbers = #tpu.dot_dimension_numbers<[1], [0], [0], [1], [0, 0, 1, 1], [], []>} : vector<16x32xbf16>, vector<32x128xbf16>, vector<16x128xf32> -> vector<16x128xf32>
    %c0_55 = arith.constant 0 : index
    %c0_56 = arith.constant 0 : index
    %c0_57 = arith.constant 0 : index
    %155 = vector.load %arg11[%c0_55, %c0_56, %c0_57] : memref<1x1x128xf32, #tpu.memory_space<vmem>>, vector<1x1x128xf32>
    %156 = vector.shape_cast %155 : vector<1x1x128xf32> to vector<1x128xf32>
    %157 = vector.broadcast %156 : vector<1x128xf32> to vector<16x128xf32>
    %158 = arith.addf %154, %157 : vector<16x128xf32>
    %cst_58 = arith.constant 5.000000e-01 : f32
    %159 = vector.broadcast %cst_58 : f32 to vector<16x128xf32>
    %160 = arith.mulf %159, %158 : vector<16x128xf32>
    %cst_59 = arith.constant 4.471500e-02 : f32
    %161 = vector.broadcast %cst_59 : f32 to vector<16x128xf32>
    %162 = arith.mulf %161, %158 : vector<16x128xf32>
    %163 = arith.mulf %162, %158 : vector<16x128xf32>
    %164 = arith.mulf %163, %158 : vector<16x128xf32>
    %165 = arith.addf %158, %164 : vector<16x128xf32>
    %cst_60 = arith.constant 0.797884583 : f32
    %166 = vector.broadcast %cst_60 : f32 to vector<16x128xf32>
    %167 = arith.mulf %166, %165 : vector<16x128xf32>
    %168 = math.tanh %167 : vector<16x128xf32>
    %cst_61 = arith.constant 1.000000e+00 : f32
    %169 = vector.broadcast %cst_61 : f32 to vector<16x128xf32>
    %170 = arith.addf %169, %168 : vector<16x128xf32>
    %171 = arith.mulf %160, %170 : vector<16x128xf32>
    %172 = arith.truncf %171 : vector<16x128xf32> to vector<16x128xbf16>
    %c0_62 = arith.constant 0 : index
    %c0_63 = arith.constant 0 : index
    %c0_64 = arith.constant 0 : index
    %173 = vector.load %arg12[%c0_62, %c0_63, %c0_64] : memref<1x128x32xbf16, #tpu.memory_space<vmem>>, vector<1x128x32xbf16>
    %174 = vector.shape_cast %173 : vector<1x128x32xbf16> to vector<128x32xbf16>
    %cst_65 = arith.constant dense<0.000000e+00> : vector<16x32xf32>
    %175 = tpu.matmul %172, %174, %cst_65 {dimension_numbers = #tpu.dot_dimension_numbers<[1], [0], [0], [1], [0, 0, 1, 1], [], []>} : vector<16x128xbf16>, vector<128x32xbf16>, vector<16x32xf32> -> vector<16x32xf32>
    %c0_66 = arith.constant 0 : index
    %c0_67 = arith.constant 0 : index
    %c0_68 = arith.constant 0 : index
    %176 = vector.load %arg13[%c0_66, %c0_67, %c0_68] : memref<1x1x32xf32, #tpu.memory_space<vmem>>, vector<1x1x32xf32>
    %177 = vector.shape_cast %176 : vector<1x1x32xf32> to vector<1x32xf32>
    %178 = vector.broadcast %177 : vector<1x32xf32> to vector<16x32xf32>
    %179 = arith.addf %175, %178 : vector<16x32xf32>
    %180 = vector.shape_cast %179 : vector<16x32xf32> to vector<2x8x32xf32>
    %181 = arith.addf %123, %180 : vector<2x8x32xf32>
    %c1_i32 = arith.constant 1 : i32
    %182 = arith.cmpi slt, %arg1, %c1_i32 : i32
    %183 = arith.extui %182 : i1 to i32
    %c0_i32_69 = arith.constant 0 : i32
    %184 = arith.cmpi ne, %183, %c0_i32_69 : i32
    scf.if %184 {
      %c0_72 = arith.constant 0 : index
      %c0_73 = arith.constant 0 : index
      %c0_74 = arith.constant 0 : index
      %188 = vector.load %arg16[%c0_72, %c0_73, %c0_74] : memref<2x8x32xf32, #tpu.memory_space<vmem>>, vector<2x8x32xf32>
      tpu.vector_store %arg16[%c0_72, %c0_73, %c0_74], %181 {strides = array<i32>} : memref<2x8x32xf32, #tpu.memory_space<vmem>>, vector<2x8x32xf32>,
    } else {
    }
    %c1_i32_70 = arith.constant 1 : i32
    %185 = arith.cmpi eq, %arg1, %c1_i32_70 : i32
    %186 = arith.extui %185 : i1 to i32
    %c0_i32_71 = arith.constant 0 : i32
    %187 = arith.cmpi ne, %186, %c0_i32_71 : i32
    scf.if %187 {
      %c0_72 = arith.constant 0 : index
      %c0_73 = arith.constant 0 : index
      %188 = vector.load %arg14[%c0_72, %c0_73] : memref<1x32xf32, #tpu.memory_space<vmem>>, vector<1x32xf32>
      %c0_74 = arith.constant 0 : index
      %c0_75 = arith.constant 0 : index
      %189 = vector.load %arg15[%c0_74, %c0_75] : memref<1x32xf32, #tpu.memory_space<vmem>>, vector<1x32xf32>
      %cst_76 = arith.constant dense<0.000000e+00> : vector<2x8xf32>
      %190 = vector.multi_reduction <add>, %181, %cst_76 [2] : vector<2x8x32xf32> to vector<2x8xf32>
      %191 = vector.shape_cast %190 : vector<2x8xf32> to vector<2x8x1xf32>
      %cst_77 = arith.constant 3.200000e+01 : f32
      %192 = vector.broadcast %cst_77 : f32 to vector<2x8x1xf32>
      %193 = arith.divf %191, %192 : vector<2x8x1xf32>
      %194 = vector.broadcast %193 : vector<2x8x1xf32> to vector<2x8x32xf32>
      %195 = arith.subf %181, %194 : vector<2x8x32xf32>
      %196 = arith.mulf %195, %195 : vector<2x8x32xf32>
      %cst_78 = arith.constant dense<0.000000e+00> : vector<2x8xf32>
      %197 = vector.multi_reduction <add>, %196, %cst_78 [2] : vector<2x8x32xf32> to vector<2x8xf32>
      %198 = vector.shape_cast %197 : vector<2x8xf32> to vector<2x8x1xf32>
      %cst_79 = arith.constant 3.200000e+01 : f32
      %199 = vector.broadcast %cst_79 : f32 to vector<2x8x1xf32>
      %200 = arith.divf %198, %199 : vector<2x8x1xf32>
      %cst_80 = arith.constant 9.99999974E-6 : f32
      %201 = vector.broadcast %cst_80 : f32 to vector<2x8x1xf32>
      %202 = arith.addf %200, %201 : vector<2x8x1xf32>
      %203 = math.rsqrt %202 : vector<2x8x1xf32>
      %204 = vector.broadcast %203 : vector<2x8x1xf32> to vector<2x8x32xf32>
      %205 = arith.mulf %195, %204 : vector<2x8x32xf32>
      %206 = vector.shape_cast %188 : vector<1x32xf32> to vector<1x1x32xf32>
      %207 = vector.broadcast %206 : vector<1x1x32xf32> to vector<2x8x32xf32>
      %208 = arith.mulf %205, %207 : vector<2x8x32xf32>
      %209 = vector.shape_cast %189 : vector<1x32xf32> to vector<1x1x32xf32>
      %210 = vector.broadcast %209 : vector<1x1x32xf32> to vector<2x8x32xf32>
      %211 = arith.addf %208, %210 : vector<2x8x32xf32>
      %c0_81 = arith.constant 0 : index
      %c0_82 = arith.constant 0 : index
      %c0_83 = arith.constant 0 : index
      %212 = vector.load %arg16[%c0_81, %c0_82, %c0_83] : memref<2x8x32xf32, #tpu.memory_space<vmem>>, vector<2x8x32xf32>
      tpu.vector_store %arg16[%c0_81, %c0_82, %c0_83], %211 {strides = array<i32>} : memref<2x8x32xf32, #tpu.memory_space<vmem>>, vector<2x8x32xf32>,
    } else {
    }
    return
  }
  func.func @transform_0(%arg0: i32, %arg1: i32) -> (i32, i32, i32) {
    %c0_i32 = arith.constant 0 : i32
    %c0_i32_0 = arith.constant 0 : i32
    %c0_i32_1 = arith.constant 0 : i32
    return %arg0, %c0_i32, %c0_i32_0 : i32, i32, i32
  }
  func.func @transform_1(%arg0: i32, %arg1: i32) -> (i32, i32, i32) {
    %c0_i32 = arith.constant 0 : i32
    %c0_i32_0 = arith.constant 0 : i32
    %c0_i32_1 = arith.constant 0 : i32
    return %arg1, %c0_i32, %c0_i32_0 : i32, i32, i32
  }
  func.func @transform_2(%arg0: i32, %arg1: i32) -> (i32, i32, i32) {
    %c0_i32 = arith.constant 0 : i32
    %c0_i32_0 = arith.constant 0 : i32
    %c0_i32_1 = arith.constant 0 : i32
    return %arg1, %c0_i32, %c0_i32_0 : i32, i32, i32
  }
  func.func @transform_3(%arg0: i32, %arg1: i32) -> (i32, i32, i32) {
    %c0_i32 = arith.constant 0 : i32
    %c0_i32_0 = arith.constant 0 : i32
    %c0_i32_1 = arith.constant 0 : i32
    return %arg1, %c0_i32, %c0_i32_0 : i32, i32, i32
  }
  func.func @transform_4(%arg0: i32, %arg1: i32) -> (i32, i32, i32) {
    %c0_i32 = arith.constant 0 : i32
    %c0_i32_0 = arith.constant 0 : i32
    %c0_i32_1 = arith.constant 0 : i32
    return %arg1, %c0_i32, %c0_i32_0 : i32, i32, i32
  }
  func.func @transform_5(%arg0: i32, %arg1: i32) -> (i32, i32, i32) {
    %c0_i32 = arith.constant 0 : i32
    %c0_i32_0 = arith.constant 0 : i32
    %c0_i32_1 = arith.constant 0 : i32
    return %arg1, %c0_i32, %c0_i32_0 : i32, i32, i32
  }
  func.func @transform_6(%arg0: i32, %arg1: i32) -> (i32, i32, i32) {
    %c0_i32 = arith.constant 0 : i32
    %c0_i32_0 = arith.constant 0 : i32
    %c0_i32_1 = arith.constant 0 : i32
    return %arg1, %c0_i32, %c0_i32_0 : i32, i32, i32
  }
  func.func @transform_7(%arg0: i32, %arg1: i32) -> (i32, i32, i32) {
    %c0_i32 = arith.constant 0 : i32
    %c0_i32_0 = arith.constant 0 : i32
    %c0_i32_1 = arith.constant 0 : i32
    return %arg1, %c0_i32, %c0_i32_0 : i32, i32, i32
  }
  func.func @transform_8(%arg0: i32, %arg1: i32) -> (i32, i32, i32) {
    %c0_i32 = arith.constant 0 : i32
    %c0_i32_0 = arith.constant 0 : i32
    %c0_i32_1 = arith.constant 0 : i32
    return %arg1, %c0_i32, %c0_i32_0 : i32, i32, i32
  }
  func.func @transform_9(%arg0: i32, %arg1: i32) -> (i32, i32, i32) {
    %c0_i32 = arith.constant 0 : i32
    %c0_i32_0 = arith.constant 0 : i32
    %c0_i32_1 = arith.constant 0 : i32
    return %arg1, %c0_i32, %c0_i32_0 : i32, i32, i32
  }
  func.func @transform_10(%arg0: i32, %arg1: i32) -> (i32, i32, i32) {
    %c0_i32 = arith.constant 0 : i32
    %c0_i32_0 = arith.constant 0 : i32
    %c0_i32_1 = arith.constant 0 : i32
    return %arg1, %c0_i32, %c0_i32_0 : i32, i32, i32
  }
  func.func @transform_11(%arg0: i32, %arg1: i32) -> (i32, i32, i32) {
    %c0_i32 = arith.constant 0 : i32
    %c0_i32_0 = arith.constant 0 : i32
    %c0_i32_1 = arith.constant 0 : i32
    return %arg1, %c0_i32, %c0_i32_0 : i32, i32, i32
  }
  func.func @transform_12(%arg0: i32, %arg1: i32) -> (i32, i32) {
    %c0_i32 = arith.constant 0 : i32
    %c0_i32_0 = arith.constant 0 : i32
    %c0_i32_1 = arith.constant 0 : i32
    return %c0_i32, %c0_i32_0 : i32, i32
  }
  func.func @transform_13(%arg0: i32, %arg1: i32) -> (i32, i32) {
    %c0_i32 = arith.constant 0 : i32
    %c0_i32_0 = arith.constant 0 : i32
    %c0_i32_1 = arith.constant 0 : i32
    return %c0_i32, %c0_i32_0 : i32, i32
  }
  func.func @transform_14(%arg0: i32, %arg1: i32) -> (i32, i32, i32) {
    %c0_i32 = arith.constant 0 : i32
    %c0_i32_0 = arith.constant 0 : i32
    %c0_i32_1 = arith.constant 0 : i32
    return %arg0, %c0_i32, %c0_i32_0 : i32, i32, i32
  }
}

</mosaic_0001>

<llo_original>
// kernel: tpu_custom_call.1
$region0: #{tpu_custom_call.1}
  #allocation0 [shape = 'u32[]', space=smem, size = 0x4, offset = 0x4, fixed_abs, tag = 'smem constant byte address 0x4 - core index']
  #allocation1 [shape = 'u32[72,128]{1,0:T(1,128)}', space=vmem, size = 0x9000, scoped, tag = 'internal scratch']
  %s0 = inlined_call_operand.vmem [shape: f32[2,8,32], index: 0, kind: input, shape index: {}]
  %s1 = inlined_call_operand.vmem [shape: f32[2,1,32], index: 1, kind: input, shape index: {}]
  %s2 = inlined_call_operand.vmem [shape: f32[2,1,32], index: 2, kind: input, shape index: {}]
  %s3 = inlined_call_operand.vmem [shape: bf16[2,32,96], index: 3, kind: input, shape index: {}]
  %s4 = inlined_call_operand.vmem [shape: bf16[2,32,32], index: 4, kind: input, shape index: {}]
  %s5 = inlined_call_operand.vmem [shape: f32[2,1,32], index: 5, kind: input, shape index: {}]
  %s6 = inlined_call_operand.vmem [shape: f32[2,1,32], index: 6, kind: input, shape index: {}]
  %s7 = inlined_call_operand.vmem [shape: f32[2,1,32], index: 7, kind: input, shape index: {}]
  %s8 = inlined_call_operand.vmem [shape: bf16[2,32,128], index: 8, kind: input, shape index: {}]
  %s9 = inlined_call_operand.vmem [shape: f32[2,1,128], index: 9, kind: input, shape index: {}]
  %s10 = inlined_call_operand.vmem [shape: bf16[2,128,32], index: 10, kind: input, shape index: {}]
  %s11 = inlined_call_operand.vmem [shape: f32[2,1,32], index: 11, kind: input, shape index: {}]
  %s12 = inlined_call_operand.vmem [shape: f32[1,32], index: 12, kind: input, shape index: {}]
  %s13 = inlined_call_operand.vmem [shape: f32[1,32], index: 13, kind: input, shape index: {}]
  %s14 = inlined_call_operand.hbm [shape: f32[2,8,32], index: 14, kind: output, shape index: {}]
  %s15 = sld [smem:[#allocation0]]
  $region101: #{tpu_custom_call.1} parent=0
    _
  %s17 = ssub.s32 1, %s15
  %s18 = scalar_select 0, %s17, %s15
  $region1: #{tpu_custom_call.1} parent=0
    #allocation2 [shape = 'u8[8192]{0}', space=vmem, size = 0x2000, scoped, tag = 'output window, operand 0, single buffered']
    #allocation3 [shape = 's32[2]{0}', space=sflag, size = 0x8, scoped, tag = 'scoped memory for tpu_custom_call.1']
    %19 = vsyncpa [#allocation3], 0
    loop: start=0, step=1, limit=4
    $region2: #{tpu_custom_call.1} parent=1 // loop_pre_header
      _
    $region3: #{tpu_custom_call.1} parent=1 // loop_header
      %s21 = sphi 0, %s25
      %p22 = scmp.ge.s32.totalorder %s21, 4
      %s28 = sphi 0, %s40
      %s29 = sphi 0, %s36
      %s30 = sphi 0, %s28
      %s31 = sphi 0, %s29
      %s32 = sphi 0, %s30
      %s33 = sphi 0, %s31
      %s43 = sphi 0, %s45
      %s46 = sphi 0, %s43
      %s47 = sphi 0, %s46
      %s63 = sphi 0, %s47
      %s69 = sphi 0, %s71
      %s72 = sphi 0, %s69
      %s73 = sphi 0, %s72
      %s89 = sphi 0, %s73
      %s95 = sphi 0, %s97
      %s98 = sphi 0, %s95
      %s99 = sphi 0, %s98
      %s115 = sphi 0, %s99
      %s121 = sphi 0, %s123
      %s124 = sphi 0, %s121
      %s125 = sphi 0, %s124
      %s141 = sphi 0, %s125
      %s147 = sphi 0, %s149
      %s150 = sphi 0, %s147
      %s151 = sphi 0, %s150
      %s167 = sphi 0, %s151
      %s173 = sphi 0, %s175
      %s176 = sphi 0, %s173
      %s177 = sphi 0, %s176
      %s193 = sphi 0, %s177
      %s199 = sphi 0, %s201
      %s202 = sphi 0, %s199
      %s203 = sphi 0, %s202
      %s219 = sphi 0, %s203
      %s225 = sphi 0, %s227
      %s228 = sphi 0, %s225
      %s229 = sphi 0, %s228
      %s245 = sphi 0, %s229
      %s251 = sphi 0, %s253
      %s254 = sphi 0, %s251
      %s255 = sphi 0, %s254
      %s271 = sphi 0, %s255
      %s277 = sphi 0, %s279
      %s280 = sphi 0, %s277
      %s281 = sphi 0, %s280
      %s297 = sphi 0, %s281
      %s303 = sphi 0, %s305
      %s306 = sphi 0, %s303
      %s307 = sphi 0, %s306
      %s323 = sphi 0, %s307
      %s329 = sphi 0, %s331
      %s332 = sphi 0, %s329
      %s333 = sphi 0, %s332
      %s349 = sphi 0, %s333
      %s353 = sphi 0, %s353
      %s355 = sphi 0, %s353
      %s356 = sphi 0, %s355
      %s370 = sphi 0, %s356
      %s374 = sphi 0, %s374
      %s376 = sphi 0, %s374
      %s377 = sphi 0, %s376
      %s391 = sphi 0, %s377
      %s397 = sphi 0, %s399
      %s400 = sphi 0, %s397
      %s401 = sphi 0, %s400
      %s417 = sphi 0, %s401
    $region4: #{tpu_custom_call.1} parent=1 // loop_header_branch
      %24 = sbr.rel (%p22) target = $region8
    $region5: #{tpu_custom_call.1} parent=1 // loop_body
      %s26 = ssub.s32 %s21, 1
      %s27 = ssub.s32 %s21, 2
      %s34 = sadd.s32 1, %s29
      %p35 = scmp.ge.s32.totalorder %s34, 2
      %s36 = scalar_select %p35, 0, %s34
      %s37 = sadd.s32 1, %s28
      %s38 = scalar_select %p35, %s37, %s28
      %p39 = scmp.ge.s32.totalorder %s38, 1
      %s40 = scalar_select %p39, 0, %s38
      %s41 = ssub.s32 %s28, %s40
      %p42 = scmp.eq.s32.totalorder %s41, 0
      %s44 = sadd.s32 %s43, 1
      %s45 = scalar_select %p42, %s43, %s44
      %p48 = pneg %p42
      %p49 = scmp.eq.s32.totalorder %s21, 1
      %p50 = por %p48, %p49
      %p51 = scmp.ne.s32.totalorder %s43, %s46
      %p52 = scmp.eq.s32.totalorder %s21, 0
      %p53 = por %p51, %p52
      %p54 = scmp.ne.s32.totalorder %s43, %s46
      %p55 = scmp.eq.s32.totalorder %s26, 1
      %p56 = por %p54, %p55
      %p57 = scmp.ne.s32.totalorder %s46, %s47
      %p58 = scmp.eq.s32.totalorder %s26, 0
      %p59 = por %p57, %p58
      %p60 = scmp.ne.s32.totalorder %s46, %s47
      %p61 = scmp.eq.s32.totalorder %s27, 1
      %p62 = por %p60, %p61
      %p64 = scmp.ne.s32.totalorder %s47, %s63
      %p65 = scmp.eq.s32.totalorder %s27, 0
      %p66 = por %p64, %p65
      %s67 = ssub.s32 %s29, %s36
      %p68 = scmp.eq.s32.totalorder %s67, 0
      %s70 = sadd.s32 %s69, 1
      %s71 = scalar_select %p68, %s69, %s70
      %p74 = pneg %p68
      %p75 = scmp.eq.s32.totalorder %s21, 1
      %p76 = por %p74, %p75
      %p77 = scmp.ne.s32.totalorder %s69, %s72
      %p78 = scmp.eq.s32.totalorder %s21, 0
      %p79 = por %p77, %p78
      %p80 = scmp.ne.s32.totalorder %s69, %s72
      %p81 = scmp.eq.s32.totalorder %s26, 1
      %p82 = por %p80, %p81
      %p83 = scmp.ne.s32.totalorder %s72, %s73
      %p84 = scmp.eq.s32.totalorder %s26, 0
      %p85 = por %p83, %p84
      %p86 = scmp.ne.s32.totalorder %s72, %s73
      %p87 = scmp.eq.s32.totalorder %s27, 1
      %p88 = por %p86, %p87
      %p90 = scmp.ne.s32.totalorder %s73, %s89
      %p91 = scmp.eq.s32.totalorder %s27, 0
      %p92 = por %p90, %p91
      %s93 = ssub.s32 %s29, %s36
      %p94 = scmp.eq.s32.totalorder %s93, 0
      %s96 = sadd.s32 %s95, 1
      %s97 = scalar_select %p94, %s95, %s96
      %p100 = pneg %p94
      %p101 = scmp.eq.s32.totalorder %s21, 1
      %p102 = por %p100, %p101
      %p103 = scmp.ne.s32.totalorder %s95, %s98
      %p104 = scmp.eq.s32.totalorder %s21, 0
      %p105 = por %p103, %p104
      %p106 = scmp.ne.s32.totalorder %s95, %s98
      %p107 = scmp.eq.s32.totalorder %s26, 1
      %p108 = por %p106, %p107
      %p109 = scmp.ne.s32.totalorder %s98, %s99
      %p110 = scmp.eq.s32.totalorder %s26, 0
      %p111 = por %p109, %p110
      %p112 = scmp.ne.s32.totalorder %s98, %s99
      %p113 = scmp.eq.s32.totalorder %s27, 1
      %p114 = por %p112, %p113
      %p116 = scmp.ne.s32.totalorder %s99, %s115
      %p117 = scmp.eq.s32.totalorder %s27, 0
      %p118 = por %p116, %p117
      %s119 = ssub.s32 %s29, %s36
      %p120 = scmp.eq.s32.totalorder %s119, 0
      %s122 = sadd.s32 %s121, 1
      %s123 = scalar_select %p120, %s121, %s122
      %p126 = pneg %p120
      %p127 = scmp.eq.s32.totalorder %s21, 1
      %p128 = por %p126, %p127
      %p129 = scmp.ne.s32.totalorder %s121, %s124
      %p130 = scmp.eq.s32.totalorder %s21, 0
      %p131 = por %p129, %p130
      %p132 = scmp.ne.s32.totalorder %s121, %s124
      %p133 = scmp.eq.s32.totalorder %s26, 1
      %p134 = por %p132, %p133
      %p135 = scmp.ne.s32.totalorder %s124, %s125
      %p136 = scmp.eq.s32.totalorder %s26, 0
      %p137 = por %p135, %p136
      %p138 = scmp.ne.s32.totalorder %s124, %s125
      %p139 = scmp.eq.s32.totalorder %s27, 1
      %p140 = por %p138, %p139
      %p142 = scmp.ne.s32.totalorder %s125, %s141
      %p143 = scmp.eq.s32.totalorder %s27, 0
      %p144 = por %p142, %p143
      %s145 = ssub.s32 %s29, %s36
      %p146 = scmp.eq.s32.totalorder %s145, 0
      %s148 = sadd.s32 %s147, 1
      %s149 = scalar_select %p146, %s147, %s148
      %p152 = pneg %p146
      %p153 = scmp.eq.s32.totalorder %s21, 1
      %p154 = por %p152, %p153
      %p155 = scmp.ne.s32.totalorder %s147, %s150
      %p156 = scmp.eq.s32.totalorder %s21, 0
      %p157 = por %p155, %p156
      %p158 = scmp.ne.s32.totalorder %s147, %s150
      %p159 = scmp.eq.s32.totalorder %s26, 1
      %p160 = por %p158, %p159
      %p161 = scmp.ne.s32.totalorder %s150, %s151
      %p162 = scmp.eq.s32.totalorder %s26, 0
      %p163 = por %p161, %p162
      %p164 = scmp.ne.s32.totalorder %s150, %s151
      %p165 = scmp.eq.s32.totalorder %s27, 1
      %p166 = por %p164, %p165
      %p168 = scmp.ne.s32.totalorder %s151, %s167
      %p169 = scmp.eq.s32.totalorder %s27, 0
      %p170 = por %p168, %p169
      %s171 = ssub.s32 %s29, %s36
      %p172 = scmp.eq.s32.totalorder %s171, 0
      %s174 = sadd.s32 %s173, 1
      %s175 = scalar_select %p172, %s173, %s174
      %p178 = pneg %p172
      %p179 = scmp.eq.s32.totalorder %s21, 1
      %p180 = por %p178, %p179
      %p181 = scmp.ne.s32.totalorder %s173, %s176
      %p182 = scmp.eq.s32.totalorder %s21, 0
      %p183 = por %p181, %p182
      %p184 = scmp.ne.s32.totalorder %s173, %s176
      %p185 = scmp.eq.s32.totalorder %s26, 1
      %p186 = por %p184, %p185
      %p187 = scmp.ne.s32.totalorder %s176, %s177
      %p188 = scmp.eq.s32.totalorder %s26, 0
      %p189 = por %p187, %p188
      %p190 = scmp.ne.s32.totalorder %s176, %s177
      %p191 = scmp.eq.s32.totalorder %s27, 1
      %p192 = por %p190, %p191
      %p194 = scmp.ne.s32.totalorder %s177, %s193
      %p195 = scmp.eq.s32.totalorder %s27, 0
      %p196 = por %p194, %p195
      %s197 = ssub.s32 %s29, %s36
      %p198 = scmp.eq.s32.totalorder %s197, 0
      %s200 = sadd.s32 %s199, 1
      %s201 = scalar_select %p198, %s199, %s200
      %p204 = pneg %p198
      %p205 = scmp.eq.s32.totalorder %s21, 1
      %p206 = por %p204, %p205
      %p207 = scmp.ne.s32.totalorder %s199, %s202
      %p208 = scmp.eq.s32.totalorder %s21, 0
      %p209 = por %p207, %p208
      %p210 = scmp.ne.s32.totalorder %s199, %s202
      %p211 = scmp.eq.s32.totalorder %s26, 1
      %p212 = por %p210, %p211
      %p213 = scmp.ne.s32.totalorder %s202, %s203
      %p214 = scmp.eq.s32.totalorder %s26, 0
      %p215 = por %p213, %p214
      %p216 = scmp.ne.s32.totalorder %s202, %s203
      %p217 = scmp.eq.s32.totalorder %s27, 1
      %p218 = por %p216, %p217
      %p220 = scmp.ne.s32.totalorder %s203, %s219
      %p221 = scmp.eq.s32.totalorder %s27, 0
      %p222 = por %p220, %p221
      %s223 = ssub.s32 %s29, %s36
      %p224 = scmp.eq.s32.totalorder %s223, 0
      %s226 = sadd.s32 %s225, 1
      %s227 = scalar_select %p224, %s225, %s226
      %p230 = pneg %p224
      %p231 = scmp.eq.s32.totalorder %s21, 1
      %p232 = por %p230, %p231
      %p233 = scmp.ne.s32.totalorder %s225, %s228
      %p234 = scmp.eq.s32.totalorder %s21, 0
      %p235 = por %p233, %p234
      %p236 = scmp.ne.s32.totalorder %s225, %s228
      %p237 = scmp.eq.s32.totalorder %s26, 1
      %p238 = por %p236, %p237
      %p239 = scmp.ne.s32.totalorder %s228, %s229
      %p240 = scmp.eq.s32.totalorder %s26, 0
      %p241 = por %p239, %p240
      %p242 = scmp.ne.s32.totalorder %s228, %s229
      %p243 = scmp.eq.s32.totalorder %s27, 1
      %p244 = por %p242, %p243
      %p246 = scmp.ne.s32.totalorder %s229, %s245
      %p247 = scmp.eq.s32.totalorder %s27, 0
      %p248 = por %p246, %p247
      %s249 = ssub.s32 %s29, %s36
      %p250 = scmp.eq.s32.totalorder %s249, 0
      %s252 = sadd.s32 %s251, 1
      %s253 = scalar_select %p250, %s251, %s252
      %p256 = pneg %p250
      %p257 = scmp.eq.s32.totalorder %s21, 1
      %p258 = por %p256, %p257
      %p259 = scmp.ne.s32.totalorder %s251, %s254
      %p260 = scmp.eq.s32.totalorder %s21, 0
      %p261 = por %p259, %p260
      %p262 = scmp.ne.s32.totalorder %s251, %s254
      %p263 = scmp.eq.s32.totalorder %s26, 1
      %p264 = por %p262, %p263
      %p265 = scmp.ne.s32.totalorder %s254, %s255
      %p266 = scmp.eq.s32.totalorder %s26, 0
      %p267 = por %p265, %p266
      %p268 = scmp.ne.s32.totalorder %s254, %s255
      %p269 = scmp.eq.s32.totalorder %s27, 1
      %p270 = por %p268, %p269
      %p272 = scmp.ne.s32.totalorder %s255, %s271
      %p273 = scmp.eq.s32.totalorder %s27, 0
      %p274 = por %p272, %p273
      %s275 = ssub.s32 %s29, %s36
      %p276 = scmp.eq.s32.totalorder %s275, 0
      %s278 = sadd.s32 %s277, 1
      %s279 = scalar_select %p276, %s277, %s278
      %p282 = pneg %p276
      %p283 = scmp.eq.s32.totalorder %s21, 1
      %p284 = por %p282, %p283
      %p285 = scmp.ne.s32.totalorder %s277, %s280
      %p286 = scmp.eq.s32.totalorder %s21, 0
      %p287 = por %p285, %p286
      %p288 = scmp.ne.s32.totalorder %s277, %s280
      %p289 = scmp.eq.s32.totalorder %s26, 1
      %p290 = por %p288, %p289
      %p291 = scmp.ne.s32.totalorder %s280, %s281
      %p292 = scmp.eq.s32.totalorder %s26, 0
      %p293 = por %p291, %p292
      %p294 = scmp.ne.s32.totalorder %s280, %s281
      %p295 = scmp.eq.s32.totalorder %s27, 1
      %p296 = por %p294, %p295
      %p298 = scmp.ne.s32.totalorder %s281, %s297
      %p299 = scmp.eq.s32.totalorder %s27, 0
      %p300 = por %p298, %p299
      %s301 = ssub.s32 %s29, %s36
      %p302 = scmp.eq.s32.totalorder %s301, 0
      %s304 = sadd.s32 %s303, 1
      %s305 = scalar_select %p302, %s303, %s304
      %p308 = pneg %p302
      %p309 = scmp.eq.s32.totalorder %s21, 1
      %p310 = por %p308, %p309
      %p311 = scmp.ne.s32.totalorder %s303, %s306
      %p312 = scmp.eq.s32.totalorder %s21, 0
      %p313 = por %p311, %p312
      %p314 = scmp.ne.s32.totalorder %s303, %s306
      %p315 = scmp.eq.s32.totalorder %s26, 1
      %p316 = por %p314, %p315
      %p317 = scmp.ne.s32.totalorder %s306, %s307
      %p318 = scmp.eq.s32.totalorder %s26, 0
      %p319 = por %p317, %p318
      %p320 = scmp.ne.s32.totalorder %s306, %s307
      %p321 = scmp.eq.s32.totalorder %s27, 1
      %p322 = por %p320, %p321
      %p324 = scmp.ne.s32.totalorder %s307, %s323
      %p325 = scmp.eq.s32.totalorder %s27, 0
      %p326 = por %p324, %p325
      %s327 = ssub.s32 %s29, %s36
      %p328 = scmp.eq.s32.totalorder %s327, 0
      %s330 = sadd.s32 %s329, 1
      %s331 = scalar_select %p328, %s329, %s330
      %p334 = pneg %p328
      %p335 = scmp.eq.s32.totalorder %s21, 1
      %p336 = por %p334, %p335
      %p337 = scmp.ne.s32.totalorder %s329, %s332
      %p338 = scmp.eq.s32.totalorder %s21, 0
      %p339 = por %p337, %p338
      %p340 = scmp.ne.s32.totalorder %s329, %s332
      %p341 = scmp.eq.s32.totalorder %s26, 1
      %p342 = por %p340, %p341
      %p343 = scmp.ne.s32.totalorder %s332, %s333
      %p344 = scmp.eq.s32.totalorder %s26, 0
      %p345 = por %p343, %p344
      %p346 = scmp.ne.s32.totalorder %s332, %s333
      %p347 = scmp.eq.s32.totalorder %s27, 1
      %p348 = por %p346, %p347
      %p350 = scmp.ne.s32.totalorder %s333, %s349
      %p351 = scmp.eq.s32.totalorder %s27, 0
      %p352 = por %p350, %p351
      %s354 = sadd.s32 %s353, 1
      %p357 = scmp.eq.s32.totalorder %s21, 1
      %p358 = scmp.ne.s32.totalorder %s353, %s355
      %p359 = scmp.eq.s32.totalorder %s21, 0
      %p360 = por %p358, %p359
      %p361 = scmp.ne.s32.totalorder %s353, %s355
      %p362 = scmp.eq.s32.totalorder %s26, 1
      %p363 = por %p361, %p362
      %p364 = scmp.ne.s32.totalorder %s355, %s356
      %p365 = scmp.eq.s32.totalorder %s26, 0
      %p366 = por %p364, %p365
      %p367 = scmp.ne.s32.totalorder %s355, %s356
      %p368 = scmp.eq.s32.totalorder %s27, 1
      %p369 = por %p367, %p368
      %p371 = scmp.ne.s32.totalorder %s356, %s370
      %p372 = scmp.eq.s32.totalorder %s27, 0
      %p373 = por %p371, %p372
      %s375 = sadd.s32 %s374, 1
      %p378 = scmp.eq.s32.totalorder %s21, 1
      %p379 = scmp.ne.s32.totalorder %s374, %s376
      %p380 = scmp.eq.s32.totalorder %s21, 0
      %p381 = por %p379, %p380
      %p382 = scmp.ne.s32.totalorder %s374, %s376
      %p383 = scmp.eq.s32.totalorder %s26, 1
      %p384 = por %p382, %p383
      %p385 = scmp.ne.s32.totalorder %s376, %s377
      %p386 = scmp.eq.s32.totalorder %s26, 0
      %p387 = por %p385, %p386
      %p388 = scmp.ne.s32.totalorder %s376, %s377
      %p389 = scmp.eq.s32.totalorder %s27, 1
      %p390 = por %p388, %p389
      %p392 = scmp.ne.s32.totalorder %s377, %s391
      %p393 = scmp.eq.s32.totalorder %s27, 0
      %p394 = por %p392, %p393
      %s395 = ssub.s32 %s28, %s40
      %p396 = scmp.eq.s32.totalorder %s395, 0
      %s398 = sadd.s32 %s397, 1
      %s399 = scalar_select %p396, %s397, %s398
      %p402 = pneg %p396
      %p403 = scmp.eq.s32.totalorder %s21, 1
      %p404 = por %p402, %p403
      %p405 = scmp.ne.s32.totalorder %s397, %s400
      %p406 = scmp.eq.s32.totalorder %s21, 0
      %p407 = por %p405, %p406
      %p408 = scmp.ne.s32.totalorder %s397, %s400
      %p409 = scmp.eq.s32.totalorder %s26, 1
      %p410 = por %p408, %p409
      %p411 = scmp.ne.s32.totalorder %s400, %s401
      %p412 = scmp.eq.s32.totalorder %s26, 0
      %p413 = por %p411, %p412
      %p414 = scmp.ne.s32.totalorder %s400, %s401
      %p415 = scmp.eq.s32.totalorder %s27, 1
      %p416 = por %p414, %p415
      %p418 = scmp.ne.s32.totalorder %s401, %s417
      %p419 = scmp.eq.s32.totalorder %s27, 0
      %p420 = por %p418, %p419
      %p421 = scmp.le.s32.totalorder 1, %s21
      %p422 = scmp.lt.s32.totalorder %s21, 3
      %p423 = pnand %p421, %p422
      %p424 = pneg %p423
      // Predicated region
      $region9: #{tpu_custom_call.1} parent=5 // pred_check
        _
      $region10: #{tpu_custom_call.1} parent=5 // pred_check_branch
        %426 = sbr.rel (%p423) target = $region12
      $region11: #{tpu_custom_call.1} parent=5 // pred_region
        %s427 = ssub.s32 %s21, 1
        // Predicated region
        $region13: #{tpu_custom_call.1} parent=11 // pred_check
          %p428 = pneg %p59
        $region14: #{tpu_custom_call.1} parent=11 // pred_check_branch
          %430 = sbr.rel (%p428) target = $region16
        $region15: #{tpu_custom_call.1} parent=11 // pred_region
          %s431 = smul.u32 2, %s30
          %p432 = scmp.lt.s32.totalorder %s431, 1
          %s433 = scalar_select %p432, %s431, 1
          %s434 = smul.addr %s433, 8
          %s435 = scalar_lea.vmem %s0, %s434
          %s436 = smul.u32 2, %s30
        $region16: #{tpu_custom_call.1} parent=11 // pred_fallthru
          _
        // Predicated region
        $region17: #{tpu_custom_call.1} parent=11 // pred_check
          %p437 = pneg %p366
        $region18: #{tpu_custom_call.1} parent=11 // pred_check_branch
          %439 = sbr.rel (%p437) target = $region20
        $region19: #{tpu_custom_call.1} parent=11 // pred_region
          _
        $region20: #{tpu_custom_call.1} parent=11 // pred_fallthru
          _
        // Predicated region
        $region21: #{tpu_custom_call.1} parent=11 // pred_check
          %p440 = pneg %p387
        $region22: #{tpu_custom_call.1} parent=11 // pred_check_branch
          %442 = sbr.rel (%p440) target = $region24
        $region23: #{tpu_custom_call.1} parent=11 // pred_region
          _
        $region24: #{tpu_custom_call.1} parent=11 // pred_fallthru
          _
      $region12: #{tpu_custom_call.1} parent=5 // pred_fallthru
        _
      %p443 = scmp.lt.s32.totalorder %s21, 2
      // Predicated region
      $region25: #{tpu_custom_call.1} parent=5 // pred_check
        %p444 = pneg %p443
      $region26: #{tpu_custom_call.1} parent=5 // pred_check_branch
        %446 = sbr.rel (%p444) target = $region28
      $region27: #{tpu_custom_call.1} parent=5 // pred_region
        // Predicated region
        $region29: #{tpu_custom_call.1} parent=27 // pred_check
          %p447 = pneg %p79
        $region30: #{tpu_custom_call.1} parent=27 // pred_check_branch
          %449 = sbr.rel (%p447) target = $region32
        $region31: #{tpu_custom_call.1} parent=27 // pred_region
          %p450 = scmp.lt.s32.totalorder %s29, 1
          %s451 = scalar_select %p450, %s29, 1
          %s452 = scalar_lea.vmem %s1, %s451
        $region32: #{tpu_custom_call.1} parent=27 // pred_fallthru
          _
        // Predicated region
        $region33: #{tpu_custom_call.1} parent=27 // pred_check
          %p453 = pneg %p105
        $region34: #{tpu_custom_call.1} parent=27 // pred_check_branch
          %455 = sbr.rel (%p453) target = $region36
        $region35: #{tpu_custom_call.1} parent=27 // pred_region
          %p456 = scmp.lt.s32.totalorder %s29, 1
          %s457 = scalar_select %p456, %s29, 1
          %s458 = scalar_lea.vmem %s2, %s457
        $region36: #{tpu_custom_call.1} parent=27 // pred_fallthru
          _
        // Predicated region
        $region37: #{tpu_custom_call.1} parent=27 // pred_check
          %p459 = pneg %p131
        $region38: #{tpu_custom_call.1} parent=27 // pred_check_branch
          %461 = sbr.rel (%p459) target = $region40
        $region39: #{tpu_custom_call.1} parent=27 // pred_region
          %p462 = scmp.lt.s32.totalorder %s29, 1
          %s463 = scalar_select %p462, %s29, 1
          %s464 = smul.addr %s463, 4
          %s465 = smul.addr %s464, 4
          %s466 = scalar_lea.vmem %s3, %s465
        $region40: #{tpu_custom_call.1} parent=27 // pred_fallthru
          _
        // Predicated region
        $region41: #{tpu_custom_call.1} parent=27 // pred_check
          %p467 = pneg %p157
        $region42: #{tpu_custom_call.1} parent=27 // pred_check_branch
          %469 = sbr.rel (%p467) target = $region44
        $region43: #{tpu_custom_call.1} parent=27 // pred_region
          %p470 = scmp.lt.s32.totalorder %s29, 1
          %s471 = scalar_select %p470, %s29, 1
          %s472 = smul.addr %s471, 4
          %s473 = smul.addr %s472, 4
          %s474 = scalar_lea.vmem %s4, %s473
        $region44: #{tpu_custom_call.1} parent=27 // pred_fallthru
          _
        // Predicated region
        $region45: #{tpu_custom_call.1} parent=27 // pred_check
          %p475 = pneg %p183
        $region46: #{tpu_custom_call.1} parent=27 // pred_check_branch
          %477 = sbr.rel (%p475) target = $region48
        $region47: #{tpu_custom_call.1} parent=27 // pred_region
          %p478 = scmp.lt.s32.totalorder %s29, 1
          %s479 = scalar_select %p478, %s29, 1
          %s480 = scalar_lea.vmem %s5, %s479
        $region48: #{tpu_custom_call.1} parent=27 // pred_fallthru
          _
        // Predicated region
        $region49: #{tpu_custom_call.1} parent=27 // pred_check
          %p481 = pneg %p209
        $region50: #{tpu_custom_call.1} parent=27 // pred_check_branch
          %483 = sbr.rel (%p481) target = $region52
        $region51: #{tpu_custom_call.1} parent=27 // pred_region
          %p484 = scmp.lt.s32.totalorder %s29, 1
          %s485 = scalar_select %p484, %s29, 1
          %s486 = scalar_lea.vmem %s6, %s485
        $region52: #{tpu_custom_call.1} parent=27 // pred_fallthru
          _
        // Predicated region
        $region53: #{tpu_custom_call.1} parent=27 // pred_check
          %p487 = pneg %p235
        $region54: #{tpu_custom_call.1} parent=27 // pred_check_branch
          %489 = sbr.rel (%p487) target = $region56
        $region55: #{tpu_custom_call.1} parent=27 // pred_region
          %p490 = scmp.lt.s32.totalorder %s29, 1
          %s491 = scalar_select %p490, %s29, 1
          %s492 = scalar_lea.vmem %s7, %s491
        $region56: #{tpu_custom_call.1} parent=27 // pred_fallthru
          _
        // Predicated region
        $region57: #{tpu_custom_call.1} parent=27 // pred_check
          %p493 = pneg %p261
        $region58: #{tpu_custom_call.1} parent=27 // pred_check_branch
          %495 = sbr.rel (%p493) target = $region60
        $region59: #{tpu_custom_call.1} parent=27 // pred_region
          %p496 = scmp.lt.s32.totalorder %s29, 1
          %s497 = scalar_select %p496, %s29, 1
          %s498 = smul.addr %s497, 4
          %s499 = smul.addr %s498, 4
          %s500 = scalar_lea.vmem %s8, %s499
        $region60: #{tpu_custom_call.1} parent=27 // pred_fallthru
          _
        // Predicated region
        $region61: #{tpu_custom_call.1} parent=27 // pred_check
          %p501 = pneg %p287
        $region62: #{tpu_custom_call.1} parent=27 // pred_check_branch
          %503 = sbr.rel (%p501) target = $region64
        $region63: #{tpu_custom_call.1} parent=27 // pred_region
          %p504 = scmp.lt.s32.totalorder %s29, 1
          %s505 = scalar_select %p504, %s29, 1
          %s506 = scalar_lea.vmem %s9, %s505
        $region64: #{tpu_custom_call.1} parent=27 // pred_fallthru
          _
        // Predicated region
        $region65: #{tpu_custom_call.1} parent=27 // pred_check
          %p507 = pneg %p313
        $region66: #{tpu_custom_call.1} parent=27 // pred_check_branch
          %509 = sbr.rel (%p507) target = $region68
        $region67: #{tpu_custom_call.1} parent=27 // pred_region
          %p510 = scmp.lt.s32.totalorder %s29, 1
          %s511 = scalar_select %p510, %s29, 1
          %s512 = smul.addr %s511, 16
          %s513 = smul.addr %s512, 4
          %s514 = scalar_lea.vmem %s10, %s513
        $region68: #{tpu_custom_call.1} parent=27 // pred_fallthru
          _
        // Predicated region
        $region69: #{tpu_custom_call.1} parent=27 // pred_check
          %p515 = pneg %p339
        $region70: #{tpu_custom_call.1} parent=27 // pred_check_branch
          %517 = sbr.rel (%p515) target = $region72
        $region71: #{tpu_custom_call.1} parent=27 // pred_region
          %p518 = scmp.lt.s32.totalorder %s29, 1
          %s519 = scalar_select %p518, %s29, 1
          %s520 = scalar_lea.vmem %s11, %s519
        $region72: #{tpu_custom_call.1} parent=27 // pred_fallthru
          _
      $region28: #{tpu_custom_call.1} parent=5 // pred_fallthru
        _
      %p521 = scmp.le.s32.totalorder 1, %s21
      %p522 = scmp.lt.s32.totalorder %s21, 3
      %p523 = pnand %p521, %p522
      %p524 = pneg %p523
      // Predicated region
      $region73: #{tpu_custom_call.1} parent=5 // pred_check
        _
      $region74: #{tpu_custom_call.1} parent=5 // pred_check_branch
        %526 = sbr.rel (%p523) target = $region76
      $region75: #{tpu_custom_call.1} parent=5 // pred_region
        %s527 = ssub.s32 %s21, 1
        %s528 = smul.u32 2, %s30
        %p529 = scmp.lt.s32.totalorder %s528, 1
        %s530 = scalar_select %p529, %s528, 1
        %s531 = smul.addr %s530, 8
        %s532 = scalar_lea.vmem %s0, %s531
        %p533 = pneg %p59
        %p534 = pneg %p56
        %p535 = scmp.lt.s32.totalorder %s31, 1
        %s536 = scalar_select %p535, %s31, 1
        %s537 = scalar_lea.vmem %s1, %s536
        %p538 = pneg %p85
        %p539 = pneg %p82
        %p540 = scmp.lt.s32.totalorder %s31, 1
        %s541 = scalar_select %p540, %s31, 1
        %s542 = scalar_lea.vmem %s2, %s541
        %p543 = pneg %p111
        %p544 = pneg %p108
        %p545 = scmp.lt.s32.totalorder %s31, 1
        %s546 = scalar_select %p545, %s31, 1
        %s547 = smul.addr %s546, 4
        %s548 = smul.addr %s547, 4
        %s549 = scalar_lea.vmem %s3, %s548
        %p550 = pneg %p137
        %p551 = pneg %p134
        %p552 = scmp.lt.s32.totalorder %s31, 1
        %s553 = scalar_select %p552, %s31, 1
        %s554 = smul.addr %s553, 4
        %s555 = smul.addr %s554, 4
        %s556 = scalar_lea.vmem %s4, %s555
        %p557 = pneg %p163
        %p558 = pneg %p160
        %p559 = scmp.lt.s32.totalorder %s31, 1
        %s560 = scalar_select %p559, %s31, 1
        %s561 = scalar_lea.vmem %s5, %s560
        %p562 = pneg %p189
        %p563 = pneg %p186
        %p564 = scmp.lt.s32.totalorder %s31, 1
        %s565 = scalar_select %p564, %s31, 1
        %s566 = scalar_lea.vmem %s6, %s565
        %p567 = pneg %p215
        %p568 = pneg %p212
        %p569 = scmp.lt.s32.totalorder %s31, 1
        %s570 = scalar_select %p569, %s31, 1
        %s571 = scalar_lea.vmem %s7, %s570
        %p572 = pneg %p241
        %p573 = pneg %p238
        %p574 = scmp.lt.s32.totalorder %s31, 1
        %s575 = scalar_select %p574, %s31, 1
        %s576 = smul.addr %s575, 4
        %s577 = smul.addr %s576, 4
        %s578 = scalar_lea.vmem %s8, %s577
        %p579 = pneg %p267
        %p580 = pneg %p264
        %p581 = scmp.lt.s32.totalorder %s31, 1
        %s582 = scalar_select %p581, %s31, 1
        %s583 = scalar_lea.vmem %s9, %s582
        %p584 = pneg %p293
        %p585 = pneg %p290
        %p586 = scmp.lt.s32.totalorder %s31, 1
        %s587 = scalar_select %p586, %s31, 1
        %s588 = smul.addr %s587, 16
        %s589 = smul.addr %s588, 4
        %s590 = scalar_lea.vmem %s10, %s589
        %p591 = pneg %p319
        %p592 = pneg %p316
        %p593 = scmp.lt.s32.totalorder %s31, 1
        %s594 = scalar_select %p593, %s31, 1
        %s595 = scalar_lea.vmem %s11, %s594
        %p596 = pneg %p345
        %p597 = pneg %p342
        %p598 = pneg %p366
        %p599 = pneg %p363
        %p600 = pneg %p387
        %p601 = pneg %p384
        %p602 = pneg %p413
        %p603 = pneg %p410
        %s604 = smul.u32 2, %s30
        %p605 = scmp.lt.s32.totalorder %s604, 1
        %s606 = scalar_select %p605, %s604, 1
        %s607 = smul.addr %s606, 8
        %s608 = scalar_lea.vmem %s0, %s607
        %s609 = smul.u32 2, %s30
        %p610 = scmp.lt.s32.totalorder %s31, 1
        %s611 = scalar_select %p610, %s31, 1
        %s612 = scalar_lea.vmem %s1, %s611
        %p613 = scmp.lt.s32.totalorder %s31, 1
        %s614 = scalar_select %p613, %s31, 1
        %s615 = scalar_lea.vmem %s2, %s614
        %p616 = scmp.lt.s32.totalorder %s31, 1
        %s617 = scalar_select %p616, %s31, 1
        %s618 = smul.addr %s617, 4
        %s619 = smul.addr %s618, 4
        %s620 = scalar_lea.vmem %s3, %s619
        %p621 = scmp.lt.s32.totalorder %s31, 1
        %s622 = scalar_select %p621, %s31, 1
        %s623 = smul.addr %s622, 4
        %s624 = smul.addr %s623, 4
        %s625 = scalar_lea.vmem %s4, %s624
        %p626 = scmp.lt.s32.totalorder %s31, 1
        %s627 = scalar_select %p626, %s31, 1
        %s628 = scalar_lea.vmem %s5, %s627
        %p629 = scmp.lt.s32.totalorder %s31, 1
        %s630 = scalar_select %p629, %s31, 1
        %s631 = scalar_lea.vmem %s6, %s630
        %p632 = scmp.lt.s32.totalorder %s31, 1
        %s633 = scalar_select %p632, %s31, 1
        %s634 = scalar_lea.vmem %s7, %s633
        %p635 = scmp.lt.s32.totalorder %s31, 1
        %s636 = scalar_select %p635, %s31, 1
        %s637 = smul.addr %s636, 4
        %s638 = smul.addr %s637, 4
        %s639 = scalar_lea.vmem %s8, %s638
        %p640 = scmp.lt.s32.totalorder %s31, 1
        %s641 = scalar_select %p640, %s31, 1
        %s642 = scalar_lea.vmem %s9, %s641
        %p643 = scmp.lt.s32.totalorder %s31, 1
        %s644 = scalar_select %p643, %s31, 1
        %s645 = smul.addr %s644, 16
        %s646 = smul.addr %s645, 4
        %s647 = scalar_lea.vmem %s10, %s646
        %p648 = scmp.lt.s32.totalorder %s31, 1
        %s649 = scalar_select %p648, %s31, 1
        %s650 = scalar_lea.vmem %s11, %s649
        %s651 = smul.u32 2, %s30
        %p653 = scmp.eq.s32.totalorder %s31, 0
        // Predicated region
        $region77: #{tpu_custom_call.1} parent=75 // pred_check
          %p654 = pneg %p653
        $region78: #{tpu_custom_call.1} parent=75 // pred_check_branch
          %656 = sbr.rel (%p654) target = $region80
        $region79: #{tpu_custom_call.1} parent=75 // pred_region
          %v657 = vld [vmem:[%s608] sm:$0xff]
          %v658 = vld [vmem:[%s608 + $0x8] sm:$0xff]
          %vm659 = vcmask 261120
          %660 = vst.msk [vmem:[#allocation2] sm:$0xff] %vm659, %v657
          %661 = vst.msk [vmem:[#allocation2 + $0x8] sm:$0xff] %vm659, %v658
        $region80: #{tpu_custom_call.1} parent=75 // pred_fallthru
          _
        %v662 = vld [vmem:[#allocation2] sm:$0xff]
        %v663 = vld [vmem:[#allocation2 + $0x8] sm:$0xff]
        %v664 = vld [vmem:[%s612] sm:$0x1]
        %v665 = vld [vmem:[%s615] sm:$0x1]
        %vm666 = vcmask 261120
        %v667 = vsel %vm666, %v662, 0.0
        %668 = vadd.xlane.f32.xlu0 %v667
        %v669 = vpop.xlane.xlu0 %668
        %v670 = vsel %vm666, %v663, 0.0
        %671 = vadd.xlane.f32.xlu0 %v670
        %v672 = vpop.xlane.xlu0 %671
        %v673 = vrcp.pop 32.0
        %v674 = vmul.f32 32.0, %v673
        %v675 = vsub.f32 1.0, %v674
        %v676 = vmul.f32 %v673, %v675
        %v677 = vadd.f32 %v673, %v676
        %vm678 = vweird.f32 %v673
        %v679 = vsel %vm678, %v673, %v677
        %v680 = vmul.f32 %v669, %v679
        %v681 = vmul.f32 %v672, %v679
        %v682 = vsub.f32 %v662, %v680
        %v683 = vsub.f32 %v663, %v681
        %v684 = vmul.f32 %v682, %v682
        %v685 = vmul.f32 %v683, %v683
        %v686 = vsel %vm666, %v684, 0.0
        %687 = vadd.xlane.f32.xlu0 %v686
        %v688 = vpop.xlane.xlu0 %687
        %v689 = vsel %vm666, %v685, 0.0
        %690 = vadd.xlane.f32.xlu0 %v689
        %v691 = vpop.xlane.xlu0 %690
        %v692 = vmul.f32 %v688, %v679
        %v693 = vmul.f32 %v691, %v679
        %v694 = vadd.f32 %v692, 1e-05
        %v695 = vadd.f32 %v693, 1e-05
        %v696 = vrsqrt.pop %v694
        %v697 = vmul.f32 %v696, %v694
        %v698 = vmul.f32 %v697, %v696
        %v699 = vmul.f32 0.5, %v698
        %v700 = vsub.f32 1.5, %v699
        %v701 = vmul.f32 %v696, %v700
        %vm702 = vweird.f32 %v694
        %vm703 = vweird.f32 %v696
        %vm704 = vmor %vm702, %vm703
        %v705 = vsel %vm704, %v696, %v701
        %v706 = vrsqrt.pop %v695
        %v707 = vmul.f32 %v706, %v695
        %v708 = vmul.f32 %v707, %v706
        %v709 = vmul.f32 0.5, %v708
        %v710 = vsub.f32 1.5, %v709
        %v711 = vmul.f32 %v706, %v710
        %vm712 = vweird.f32 %v695
        %vm713 = vweird.f32 %v706
        %vm714 = vmor %vm712, %vm713
        %v715 = vsel %vm714, %v706, %v711
        %v716 = vmul.f32 %v682, %v705
        %v717 = vmul.f32 %v683, %v715
        %v719 = vperm.slane %v664, 0
        %v721 = vmul.f32 %v716, %v719
        %v722 = vmul.f32 %v717, %v719
        %v724 = vperm.slane %v665, 0
        %v726 = vadd.f32 %v721, %v724
        %v727 = vadd.f32 %v722, %v724
        %v728 = vpack.c.bf16 %v727, %v726
        %v729 = vld [vmem:[%s620] sm:$0xf]
        %v730 = vld [vmem:[%s620 + $0x4] sm:$0xf]
        %v731 = vld [vmem:[%s620 + $0x8] sm:$0xf]
        %v732 = vld [vmem:[%s620 + $0xc] sm:$0xf]
        %v737 = vunpack.c.l.b16 %v729
        %v738 = vunpack.c.l.b16 %v730
        %v739 = vunpack.c.l.b16 %v731
        %v740 = vunpack.c.l.b16 %v732
        %v741 = vpack.c.b16 %v738, %v737
        %v742 = vpack.c.b16 %v740, %v739
        %v746 = vsel %vm666, %v728, 0
        %748 = vmatpush.bf16.msra.mxu0 0
        %749 = vmatpush.bf16.msra.mxu0 0
        %750 = vmatpush.bf16.msra.mxu0 0
        %751 = vmatpush.bf16.msra.mxu0 0
        %752 = vmatpush.bf16.msra.mxu0 0
        %753 = vmatpush.bf16.msra.mxu0 0
        %754 = vmatpush.bf16.msra.mxu0 %v742
        %755 = vmatpush.bf16.msra.mxu0 %v741
        %756 = vmatmul.bf16.gmra.mxu0 %v746
        %v757 = vpop.f32.mrf.mxu0
        %v758 = vadd.f32 0.0, %v757
        %v759 = vpop.f32.mrf.mxu0
        %v760 = vadd.f32 0.0, %v759
        %761 = vdwg.mxu0
        %v762 = vpack.c.bf16 %v758, %v758
        %v763 = vpack.c.bf16 %v760, %v760
        %v765 = vunpack.c.l.b16 %v762
        %v766 = vpack.c.b16 %v765, %v765
        %767 = vrot.lane.b32.xlu0 %v766, 96
        %v768 = vpop.permute.xlu0 %767
        %vm769 = vcmask 64512
        %v771 = vsel %vm769, %v762, 0
        %v774 = vsel %vm769, %v768, 0
        %776 = vmatpush.bf16.xpose.msra.mxu0 0
        %777 = vmatpush.bf16.xpose.msra.mxu0 0
        %778 = vmatpush.bf16.xpose.msra.mxu0 0
        %779 = vmatpush.bf16.xpose.msra.mxu0 0
        %780 = vmatpush.bf16.xpose.msra.mxu0 0
        %781 = vmatpush.bf16.xpose.msra.mxu0 0
        %782 = vmatpush.bf16.xpose.msra.mxu0 0
        %783 = vmatpush.bf16.xpose.msra.mxu0 %v774
        %784 = vmatmul.bf16.gmra.mxu0 %v771
        %v785 = vpop.f32.mrf.mxu0
        %v786 = vadd.f32 0.0, %v785
        %v787 = vpop.f32.mrf.mxu0
        %788 = vdwg.mxu0
        %v790 = vunpack.c.l.b16 %v763
        %v791 = vpack.c.b16 %v790, %v790
        %792 = vrot.lane.b32.xlu0 %v791, 96
        %v793 = vpop.permute.xlu0 %792
        %v795 = vsel %vm769, %v763, 0
        %v798 = vsel %vm769, %v793, 0
        %800 = vmatpush.bf16.xpose.msra.mxu0 0
        %801 = vmatpush.bf16.xpose.msra.mxu0 0
        %802 = vmatpush.bf16.xpose.msra.mxu0 0
        %803 = vmatpush.bf16.xpose.msra.mxu0 0
        %804 = vmatpush.bf16.xpose.msra.mxu0 0
        %805 = vmatpush.bf16.xpose.msra.mxu0 0
        %806 = vmatpush.bf16.xpose.msra.mxu0 0
        %807 = vmatpush.bf16.xpose.msra.mxu0 %v798
        %808 = vmatmul.bf16.gmra.mxu0 %v795
        %v809 = vpop.f32.mrf.mxu0
        %v810 = vadd.f32 0.0, %v809
        %v811 = vpop.f32.mrf.mxu0
        %812 = vdwg.mxu0
        %v813 = vsel %vm769, %v786, -inf
        %814 = vmax.xlane.f32.xlu0 %v813
        %v815 = vpop.xlane.xlu0 %814
        %v816 = vsel %vm769, %v810, -inf
        %817 = vmax.xlane.f32.xlu0 %v816
        %v818 = vpop.xlane.xlu0 %817
        %v819 = vsub.f32 %v786, %v815
        %v820 = vsub.f32 %v810, %v818
        %v821 = vmul.f32 %v819, 1.442695
        %v822 = vpow.pop %v821
        %v823 = vmul.f32 %v820, 1.442695
        %v824 = vpow.pop %v823
        %v825 = vsel %vm769, %v822, 0.0
        %826 = vadd.xlane.f32.xlu0 %v825
        %v827 = vpop.xlane.xlu0 %826
        %v828 = vsel %vm769, %v824, 0.0
        %829 = vadd.xlane.f32.xlu0 %v828
        %v830 = vpop.xlane.xlu0 %829
        %v831 = vrcp.pop %v827
        %v832 = vrcp.pop %v830
        %v833 = vmul.f32 %v822, %v831
        %v834 = vmul.f32 %v824, %v832
        %v835 = vpack.c.bf16 %v833, %v833
        %v836 = vpack.c.bf16 %v834, %v834
        %837 = vrot.lane.b32.xlu0 %v766, 64
        %v838 = vpop.permute.xlu0 %837
        %v840 = vsel %vm769, %v835, 0
        %vm842 = vcmask 1043456
        %v844 = vsel %vm842, %v838, 0
        %846 = vmatpush.bf16.msra.mxu0 0
        %847 = vmatpush.bf16.msra.mxu0 0
        %848 = vmatpush.bf16.msra.mxu0 0
        %849 = vmatpush.bf16.msra.mxu0 0
        %850 = vmatpush.bf16.msra.mxu0 0
        %851 = vmatpush.bf16.msra.mxu0 0
        %852 = vmatpush.bf16.msra.mxu0 0
        %853 = vmatpush.bf16.msra.mxu0 %v844
        %854 = vmatmul.bf16.gmra.mxu0 %v840
        %v855 = vpop.f32.mrf.mxu0
        %v856 = vadd.f32 0.0, %v855
        %v857 = vpop.f32.mrf.mxu0
        %858 = vdwg.mxu0
        %859 = vrot.lane.b32.xlu0 %v791, 64
        %v860 = vpop.permute.xlu0 %859
        %v862 = vsel %vm769, %v836, 0
        %v865 = vsel %vm842, %v860, 0
        %867 = vmatpush.bf16.msra.mxu0 0
        %868 = vmatpush.bf16.msra.mxu0 0
        %869 = vmatpush.bf16.msra.mxu0 0
        %870 = vmatpush.bf16.msra.mxu0 0
        %871 = vmatpush.bf16.msra.mxu0 0
        %872 = vmatpush.bf16.msra.mxu0 0
        %873 = vmatpush.bf16.msra.mxu0 0
        %874 = vmatpush.bf16.msra.mxu0 %v865
        %875 = vmatmul.bf16.gmra.mxu0 %v862
        %v876 = vpop.f32.mrf.mxu0
        %v877 = vadd.f32 0.0, %v876
        %v878 = vpop.f32.mrf.mxu0
        %879 = vdwg.mxu0
        %880 = vrot.lane.b32.xlu0 %v766, 120
        %v881 = vpop.permute.xlu0 %880
        %882 = vrot.lane.b32.xlu0 %v766, 88
        %v883 = vpop.permute.xlu0 %882
        %v885 = vsel %vm769, %v881, 0
        %v888 = vsel %vm769, %v883, 0
        %890 = vmatpush.bf16.xpose.msra.mxu0 0
        %891 = vmatpush.bf16.xpose.msra.mxu0 0
        %892 = vmatpush.bf16.xpose.msra.mxu0 0
        %893 = vmatpush.bf16.xpose.msra.mxu0 0
        %894 = vmatpush.bf16.xpose.msra.mxu0 0
        %895 = vmatpush.bf16.xpose.msra.mxu0 0
        %896 = vmatpush.bf16.xpose.msra.mxu0 0
        %897 = vmatpush.bf16.xpose.msra.mxu0 %v888
        %898 = vmatmul.bf16.gmra.mxu0 %v885
        %v899 = vpop.f32.mrf.mxu0
        %v900 = vadd.f32 0.0, %v899
        %v901 = vpop.f32.mrf.mxu0
        %902 = vdwg.mxu0
        %903 = vrot.lane.b32.xlu0 %v791, 120
        %v904 = vpop.permute.xlu0 %903
        %905 = vrot.lane.b32.xlu0 %v791, 88
        %v906 = vpop.permute.xlu0 %905
        %v908 = vsel %vm769, %v904, 0
        %v911 = vsel %vm769, %v906, 0
        %913 = vmatpush.bf16.xpose.msra.mxu0 0
        %914 = vmatpush.bf16.xpose.msra.mxu0 0
        %915 = vmatpush.bf16.xpose.msra.mxu0 0
        %916 = vmatpush.bf16.xpose.msra.mxu0 0
        %917 = vmatpush.bf16.xpose.msra.mxu0 0
        %918 = vmatpush.bf16.xpose.msra.mxu0 0
        %919 = vmatpush.bf16.xpose.msra.mxu0 0
        %920 = vmatpush.bf16.xpose.msra.mxu0 %v911
        %921 = vmatmul.bf16.gmra.mxu0 %v908
        %v922 = vpop.f32.mrf.mxu0
        %v923 = vadd.f32 0.0, %v922
        %v924 = vpop.f32.mrf.mxu0
        %925 = vdwg.mxu0
        %v926 = vsel %vm769, %v900, -inf
        %927 = vmax.xlane.f32.xlu0 %v926
        %v928 = vpop.xlane.xlu0 %927
        %v929 = vsel %vm769, %v923, -inf
        %930 = vmax.xlane.f32.xlu0 %v929
        %v931 = vpop.xlane.xlu0 %930
        %v932 = vsub.f32 %v900, %v928
        %v933 = vsub.f32 %v923, %v931
        %v934 = vmul.f32 %v932, 1.442695
        %v935 = vpow.pop %v934
        %v936 = vmul.f32 %v933, 1.442695
        %v937 = vpow.pop %v936
        %v938 = vsel %vm769, %v935, 0.0
        %939 = vadd.xlane.f32.xlu0 %v938
        %v940 = vpop.xlane.xlu0 %939
        %v941 = vsel %vm769, %v937, 0.0
        %942 = vadd.xlane.f32.xlu0 %v941
        %v943 = vpop.xlane.xlu0 %942
        %v944 = vrcp.pop %v940
        %v945 = vrcp.pop %v943
        %v946 = vmul.f32 %v935, %v944
        %v947 = vmul.f32 %v937, %v945
        %v948 = vpack.c.bf16 %v946, %v946
        %v949 = vpack.c.bf16 %v947, %v947
        %950 = vrot.lane.b32.xlu0 %v766, 56
        %v951 = vpop.permute.xlu0 %950
        %v953 = vsel %vm769, %v948, 0
        %v956 = vsel %vm842, %v951, 0
        %958 = vmatpush.bf16.msra.mxu0 0
        %959 = vmatpush.bf16.msra.mxu0 0
        %960 = vmatpush.bf16.msra.mxu0 0
        %961 = vmatpush.bf16.msra.mxu0 0
        %962 = vmatpush.bf16.msra.mxu0 0
        %963 = vmatpush.bf16.msra.mxu0 0
        %964 = vmatpush.bf16.msra.mxu0 0
        %965 = vmatpush.bf16.msra.mxu0 %v956
        %966 = vmatmul.bf16.gmra.mxu0 %v953
        %v967 = vpop.f32.mrf.mxu0
        %v968 = vadd.f32 0.0, %v967
        %v969 = vpop.f32.mrf.mxu0
        %970 = vdwg.mxu0
        %971 = vrot.lane.b32.xlu0 %v791, 56
        %v972 = vpop.permute.xlu0 %971
        %v974 = vsel %vm769, %v949, 0
        %v977 = vsel %vm842, %v972, 0
        %979 = vmatpush.bf16.msra.mxu0 0
        %980 = vmatpush.bf16.msra.mxu0 0
        %981 = vmatpush.bf16.msra.mxu0 0
        %982 = vmatpush.bf16.msra.mxu0 0
        %983 = vmatpush.bf16.msra.mxu0 0
        %984 = vmatpush.bf16.msra.mxu0 0
        %985 = vmatpush.bf16.msra.mxu0 0
        %986 = vmatpush.bf16.msra.mxu0 %v977
        %987 = vmatmul.bf16.gmra.mxu0 %v974
        %v988 = vpop.f32.mrf.mxu0
        %v989 = vadd.f32 0.0, %v988
        %v990 = vpop.f32.mrf.mxu0
        %991 = vdwg.mxu0
        %992 = vrot.lane.b32.xlu0 %v766, 112
        %v993 = vpop.permute.xlu0 %992
        %994 = vrot.lane.b32.xlu0 %v766, 80
        %v995 = vpop.permute.xlu0 %994
        %v997 = vsel %vm769, %v993, 0
        %v1000 = vsel %vm769, %v995, 0
        %1002 = vmatpush.bf16.xpose.msra.mxu0 0
        %1003 = vmatpush.bf16.xpose.msra.mxu0 0
        %1004 = vmatpush.bf16.xpose.msra.mxu0 0
        %1005 = vmatpush.bf16.xpose.msra.mxu0 0
        %1006 = vmatpush.bf16.xpose.msra.mxu0 0
        %1007 = vmatpush.bf16.xpose.msra.mxu0 0
        %1008 = vmatpush.bf16.xpose.msra.mxu0 0
        %1009 = vmatpush.bf16.xpose.msra.mxu0 %v1000
        %1010 = vmatmul.bf16.gmra.mxu0 %v997
        %v1011 = vpop.f32.mrf.mxu0
        %v1012 = vadd.f32 0.0, %v1011
        %v1013 = vpop.f32.mrf.mxu0
        %1014 = vdwg.mxu0
        %1015 = vrot.lane.b32.xlu0 %v791, 112
        %v1016 = vpop.permute.xlu0 %1015
        %1017 = vrot.lane.b32.xlu0 %v791, 80
        %v1018 = vpop.permute.xlu0 %1017
        %v1020 = vsel %vm769, %v1016, 0
        %v1023 = vsel %vm769, %v1018, 0
        %1025 = vmatpush.bf16.xpose.msra.mxu0 0
        %1026 = vmatpush.bf16.xpose.msra.mxu0 0
        %1027 = vmatpush.bf16.xpose.msra.mxu0 0
        %1028 = vmatpush.bf16.xpose.msra.mxu0 0
        %1029 = vmatpush.bf16.xpose.msra.mxu0 0
        %1030 = vmatpush.bf16.xpose.msra.mxu0 0
        %1031 = vmatpush.bf16.xpose.msra.mxu0 0
        %1032 = vmatpush.bf16.xpose.msra.mxu0 %v1023
        %1033 = vmatmul.bf16.gmra.mxu0 %v1020
        %v1034 = vpop.f32.mrf.mxu0
        %v1035 = vadd.f32 0.0, %v1034
        %v1036 = vpop.f32.mrf.mxu0
        %1037 = vdwg.mxu0
        %v1038 = vsel %vm769, %v1012, -inf
        %1039 = vmax.xlane.f32.xlu0 %v1038
        %v1040 = vpop.xlane.xlu0 %1039
        %v1041 = vsel %vm769, %v1035, -inf
        %1042 = vmax.xlane.f32.xlu0 %v1041
        %v1043 = vpop.xlane.xlu0 %1042
        %v1044 = vsub.f32 %v1012, %v1040
        %v1045 = vsub.f32 %v1035, %v1043
        %v1046 = vmul.f32 %v1044, 1.442695
        %v1047 = vpow.pop %v1046
        %v1048 = vmul.f32 %v1045, 1.442695
        %v1049 = vpow.pop %v1048
        %v1050 = vsel %vm769, %v1047, 0.0
        %1051 = vadd.xlane.f32.xlu0 %v1050
        %v1052 = vpop.xlane.xlu0 %1051
        %v1053 = vsel %vm769, %v1049, 0.0
        %1054 = vadd.xlane.f32.xlu0 %v1053
        %v1055 = vpop.xlane.xlu0 %1054
        %v1056 = vrcp.pop %v1052
        %v1057 = vrcp.pop %v1055
        %v1058 = vmul.f32 %v1047, %v1056
        %v1059 = vmul.f32 %v1049, %v1057
        %v1060 = vpack.c.bf16 %v1058, %v1058
        %v1061 = vpack.c.bf16 %v1059, %v1059
        %1062 = vrot.lane.b32.xlu0 %v766, 48
        %v1063 = vpop.permute.xlu0 %1062
        %v1065 = vsel %vm769, %v1060, 0
        %v1068 = vsel %vm842, %v1063, 0
        %1070 = vmatpush.bf16.msra.mxu0 0
        %1071 = vmatpush.bf16.msra.mxu0 0
        %1072 = vmatpush.bf16.msra.mxu0 0
        %1073 = vmatpush.bf16.msra.mxu0 0
        %1074 = vmatpush.bf16.msra.mxu0 0
        %1075 = vmatpush.bf16.msra.mxu0 0
        %1076 = vmatpush.bf16.msra.mxu0 0
        %1077 = vmatpush.bf16.msra.mxu0 %v1068
        %1078 = vmatmul.bf16.gmra.mxu0 %v1065
        %v1079 = vpop.f32.mrf.mxu0
        %v1080 = vadd.f32 0.0, %v1079
        %v1081 = vpop.f32.mrf.mxu0
        %1082 = vdwg.mxu0
        %1083 = vrot.lane.b32.xlu0 %v791, 48
        %v1084 = vpop.permute.xlu0 %1083
        %v1086 = vsel %vm769, %v1061, 0
        %v1089 = vsel %vm842, %v1084, 0
        %1091 = vmatpush.bf16.msra.mxu0 0
        %1092 = vmatpush.bf16.msra.mxu0 0
        %1093 = vmatpush.bf16.msra.mxu0 0
        %1094 = vmatpush.bf16.msra.mxu0 0
        %1095 = vmatpush.bf16.msra.mxu0 0
        %1096 = vmatpush.bf16.msra.mxu0 0
        %1097 = vmatpush.bf16.msra.mxu0 0
        %1098 = vmatpush.bf16.msra.mxu0 %v1089
        %1099 = vmatmul.bf16.gmra.mxu0 %v1086
        %v1100 = vpop.f32.mrf.mxu0
        %v1101 = vadd.f32 0.0, %v1100
        %v1102 = vpop.f32.mrf.mxu0
        %1103 = vdwg.mxu0
        %1104 = vrot.lane.b32.xlu0 %v766, 104
        %v1105 = vpop.permute.xlu0 %1104
        %1106 = vrot.lane.b32.xlu0 %v766, 72
        %v1107 = vpop.permute.xlu0 %1106
        %v1109 = vsel %vm769, %v1105, 0
        %v1112 = vsel %vm769, %v1107, 0
        %1114 = vmatpush.bf16.xpose.msra.mxu0 0
        %1115 = vmatpush.bf16.xpose.msra.mxu0 0
        %1116 = vmatpush.bf16.xpose.msra.mxu0 0
        %1117 = vmatpush.bf16.xpose.msra.mxu0 0
        %1118 = vmatpush.bf16.xpose.msra.mxu0 0
        %1119 = vmatpush.bf16.xpose.msra.mxu0 0
        %1120 = vmatpush.bf16.xpose.msra.mxu0 0
        %1121 = vmatpush.bf16.xpose.msra.mxu0 %v1112
        %1122 = vmatmul.bf16.gmra.mxu0 %v1109
        %v1123 = vpop.f32.mrf.mxu0
        %v1124 = vadd.f32 0.0, %v1123
        %v1125 = vpop.f32.mrf.mxu0
        %1126 = vdwg.mxu0
        %1127 = vrot.lane.b32.xlu0 %v791, 104
        %v1128 = vpop.permute.xlu0 %1127
        %1129 = vrot.lane.b32.xlu0 %v791, 72
        %v1130 = vpop.permute.xlu0 %1129
        %v1132 = vsel %vm769, %v1128, 0
        %v1135 = vsel %vm769, %v1130, 0
        %1137 = vmatpush.bf16.xpose.msra.mxu0 0
        %1138 = vmatpush.bf16.xpose.msra.mxu0 0
        %1139 = vmatpush.bf16.xpose.msra.mxu0 0
        %1140 = vmatpush.bf16.xpose.msra.mxu0 0
        %1141 = vmatpush.bf16.xpose.msra.mxu0 0
        %1142 = vmatpush.bf16.xpose.msra.mxu0 0
        %1143 = vmatpush.bf16.xpose.msra.mxu0 0
        %1144 = vmatpush.bf16.xpose.msra.mxu0 %v1135
        %1145 = vmatmul.bf16.gmra.mxu0 %v1132
        %v1146 = vpop.f32.mrf.mxu0
        %v1147 = vadd.f32 0.0, %v1146
        %v1148 = vpop.f32.mrf.mxu0
        %1149 = vdwg.mxu0
        %v1150 = vsel %vm769, %v1124, -inf
        %1151 = vmax.xlane.f32.xlu0 %v1150
        %v1152 = vpop.xlane.xlu0 %1151
        %v1153 = vsel %vm769, %v1147, -inf
        %1154 = vmax.xlane.f32.xlu0 %v1153
        %v1155 = vpop.xlane.xlu0 %1154
        %v1156 = vsub.f32 %v1124, %v1152
        %v1157 = vsub.f32 %v1147, %v1155
        %v1158 = vmul.f32 %v1156, 1.442695
        %v1159 = vpow.pop %v1158
        %v1160 = vmul.f32 %v1157, 1.442695
        %v1161 = vpow.pop %v1160
        %v1162 = vsel %vm769, %v1159, 0.0
        %1163 = vadd.xlane.f32.xlu0 %v1162
        %v1164 = vpop.xlane.xlu0 %1163
        %v1165 = vsel %vm769, %v1161, 0.0
        %1166 = vadd.xlane.f32.xlu0 %v1165
        %v1167 = vpop.xlane.xlu0 %1166
        %v1168 = vrcp.pop %v1164
        %v1169 = vrcp.pop %v1167
        %v1170 = vmul.f32 %v1159, %v1168
        %v1171 = vmul.f32 %v1161, %v1169
        %v1172 = vpack.c.bf16 %v1170, %v1170
        %v1173 = vpack.c.bf16 %v1171, %v1171
        %1174 = vrot.lane.b32.xlu0 %v766, 40
        %v1175 = vpop.permute.xlu0 %1174
        %v1177 = vsel %vm769, %v1172, 0
        %v1180 = vsel %vm842, %v1175, 0
        %1182 = vmatpush.bf16.msra.mxu0 0
        %1183 = vmatpush.bf16.msra.mxu0 0
        %1184 = vmatpush.bf16.msra.mxu0 0
        %1185 = vmatpush.bf16.msra.mxu0 0
        %1186 = vmatpush.bf16.msra.mxu0 0
        %1187 = vmatpush.bf16.msra.mxu0 0
        %1188 = vmatpush.bf16.msra.mxu0 0
        %1189 = vmatpush.bf16.msra.mxu0 %v1180
        %1190 = vmatmul.bf16.gmra.mxu0 %v1177
        %v1191 = vpop.f32.mrf.mxu0
        %v1192 = vadd.f32 0.0, %v1191
        %v1193 = vpop.f32.mrf.mxu0
        %1194 = vdwg.mxu0
        %1195 = vrot.lane.b32.xlu0 %v791, 40
        %v1196 = vpop.permute.xlu0 %1195
        %v1198 = vsel %vm769, %v1173, 0
        %v1201 = vsel %vm842, %v1196, 0
        %1203 = vmatpush.bf16.msra.mxu0 0
        %1204 = vmatpush.bf16.msra.mxu0 0
        %1205 = vmatpush.bf16.msra.mxu0 0
        %1206 = vmatpush.bf16.msra.mxu0 0
        %1207 = vmatpush.bf16.msra.mxu0 0
        %1208 = vmatpush.bf16.msra.mxu0 0
        %1209 = vmatpush.bf16.msra.mxu0 0
        %1210 = vmatpush.bf16.msra.mxu0 %v1201
        %1211 = vmatmul.bf16.gmra.mxu0 %v1198
        %v1212 = vpop.f32.mrf.mxu0
        %v1213 = vadd.f32 0.0, %v1212
        %v1214 = vpop.f32.mrf.mxu0
        %1215 = vdwg.mxu0
        %1218 = vrot.lane.b32.xlu0 %v968, 8
        %v1219 = vpop.permute.xlu0 %1218
        %1220 = vrot.lane.b32.xlu0 %v989, 8
        %v1221 = vpop.permute.xlu0 %1220
        %1226 = vrot.lane.b32.xlu0 %v1080, 16
        %v1227 = vpop.permute.xlu0 %1226
        %1228 = vrot.lane.b32.xlu0 %v1101, 16
        %v1229 = vpop.permute.xlu0 %1228
        %1234 = vrot.lane.b32.xlu0 %v1192, 24
        %v1235 = vpop.permute.xlu0 %1234
        %1236 = vrot.lane.b32.xlu0 %v1213, 24
        %v1237 = vpop.permute.xlu0 %1236
        %v1240 = vsel %vm769, %v856, %v1219
        %v1241 = vsel %vm769, %v877, %v1221
        %vm1242 = vcmask 130048
        %v1243 = vsel %vm1242, %v1240, %v1227
        %v1244 = vsel %vm1242, %v1241, %v1229
        %vm1245 = vcmask 195584
        %v1246 = vsel %vm1245, %v1243, %v1235
        %v1247 = vsel %vm1245, %v1244, %v1237
        %v1248 = vpack.c.bf16 %v1247, %v1246
        %v1249 = vld [vmem:[%s625] sm:$0xf]
        %v1250 = vld [vmem:[%s625 + $0x4] sm:$0xf]
        %v1251 = vld [vmem:[%s625 + $0x8] sm:$0xf]
        %v1252 = vld [vmem:[%s625 + $0xc] sm:$0xf]
        %v1253 = vld [vmem:[%s628] sm:$0x1]
        %v1255 = vperm.slane %v1253, 0
        %v1261 = vunpack.c.l.b16 %v1249
        %v1262 = vunpack.c.l.b16 %v1250
        %v1263 = vunpack.c.l.b16 %v1251
        %v1264 = vunpack.c.l.b16 %v1252
        %v1265 = vpack.c.b16 %v1262, %v1261
        %v1266 = vpack.c.b16 %v1264, %v1263
        %v1270 = vsel %vm666, %v1248, 0
        %1272 = vmatpush.bf16.msra.mxu0 0
        %1273 = vmatpush.bf16.msra.mxu0 0
        %1274 = vmatpush.bf16.msra.mxu0 0
        %1275 = vmatpush.bf16.msra.mxu0 0
        %1276 = vmatpush.bf16.msra.mxu0 0
        %1277 = vmatpush.bf16.msra.mxu0 0
        %1278 = vmatpush.bf16.msra.mxu0 %v1266
        %1279 = vmatpush.bf16.msra.mxu0 %v1265
        %1280 = vmatmul.bf16.gmra.mxu0 %v1270
        %v1281 = vpop.f32.mrf.mxu0
        %v1282 = vadd.f32 %v1255, %v1281
        %v1283 = vpop.f32.mrf.mxu0
        %v1284 = vadd.f32 %v1255, %v1283
        %1285 = vdwg.mxu0
        %v1286 = vadd.f32 %v662, %v1282
        %v1287 = vadd.f32 %v663, %v1284
        %v1288 = vld [vmem:[%s631] sm:$0x1]
        %v1289 = vld [vmem:[%s634] sm:$0x1]
        %v1290 = vsel %vm666, %v1286, 0.0
        %1291 = vadd.xlane.f32.xlu0 %v1290
        %v1292 = vpop.xlane.xlu0 %1291
        %v1293 = vsel %vm666, %v1287, 0.0
        %1294 = vadd.xlane.f32.xlu0 %v1293
        %v1295 = vpop.xlane.xlu0 %1294
        %v1296 = vmul.f32 %v1292, %v679
        %v1297 = vmul.f32 %v1295, %v679
        %v1298 = vsub.f32 %v1286, %v1296
        %v1299 = vsub.f32 %v1287, %v1297
        %v1300 = vmul.f32 %v1298, %v1298
        %v1301 = vmul.f32 %v1299, %v1299
        %v1302 = vsel %vm666, %v1300, 0.0
        %1303 = vadd.xlane.f32.xlu0 %v1302
        %v1304 = vpop.xlane.xlu0 %1303
        %v1305 = vsel %vm666, %v1301, 0.0
        %1306 = vadd.xlane.f32.xlu0 %v1305
        %v1307 = vpop.xlane.xlu0 %1306
        %v1308 = vmul.f32 %v1304, %v679
        %v1309 = vmul.f32 %v1307, %v679
        %v1310 = vadd.f32 %v1308, 1e-05
        %v1311 = vadd.f32 %v1309, 1e-05
        %v1312 = vrsqrt.pop %v1310
        %v1313 = vmul.f32 %v1312, %v1310
        %v1314 = vmul.f32 %v1313, %v1312
        %v1315 = vmul.f32 0.5, %v1314
        %v1316 = vsub.f32 1.5, %v1315
        %v1317 = vmul.f32 %v1312, %v1316
        %vm1318 = vweird.f32 %v1310
        %vm1319 = vweird.f32 %v1312
        %vm1320 = vmor %vm1318, %vm1319
        %v1321 = vsel %vm1320, %v1312, %v1317
        %v1322 = vrsqrt.pop %v1311
        %v1323 = vmul.f32 %v1322, %v1311
        %v1324 = vmul.f32 %v1323, %v1322
        %v1325 = vmul.f32 0.5, %v1324
        %v1326 = vsub.f32 1.5, %v1325
        %v1327 = vmul.f32 %v1322, %v1326
        %vm1328 = vweird.f32 %v1311
        %vm1329 = vweird.f32 %v1322
        %vm1330 = vmor %vm1328, %vm1329
        %v1331 = vsel %vm1330, %v1322, %v1327
        %v1332 = vmul.f32 %v1298, %v1321
        %v1333 = vmul.f32 %v1299, %v1331
        %v1335 = vperm.slane %v1288, 0
        %v1337 = vmul.f32 %v1332, %v1335
        %v1338 = vmul.f32 %v1333, %v1335
        %v1340 = vperm.slane %v1289, 0
        %v1342 = vadd.f32 %v1337, %v1340
        %v1343 = vadd.f32 %v1338, %v1340
        %v1344 = vpack.c.bf16 %v1343, %v1342
        %v1345 = vld [vmem:[%s639] sm:$0xf]
        %v1346 = vld [vmem:[%s639 + $0x4] sm:$0xf]
        %v1347 = vld [vmem:[%s639 + $0x8] sm:$0xf]
        %v1348 = vld [vmem:[%s639 + $0xc] sm:$0xf]
        %v1349 = vld [vmem:[%s642] sm:$0x1]
        %v1351 = vperm.slane %v1349, 0
        %v1357 = vunpack.c.l.b16 %v1345
        %v1358 = vunpack.c.l.b16 %v1346
        %v1359 = vunpack.c.l.b16 %v1347
        %v1360 = vunpack.c.l.b16 %v1348
        %v1361 = vpack.c.b16 %v1358, %v1357
        %v1362 = vpack.c.b16 %v1360, %v1359
        %v1366 = vsel %vm666, %v1344, 0
        %1368 = vmatpush.bf16.msra.mxu0 0
        %1369 = vmatpush.bf16.msra.mxu0 0
        %1370 = vmatpush.bf16.msra.mxu0 0
        %1371 = vmatpush.bf16.msra.mxu0 0
        %1372 = vmatpush.bf16.msra.mxu0 0
        %1373 = vmatpush.bf16.msra.mxu0 0
        %1374 = vmatpush.bf16.msra.mxu0 %v1362
        %1375 = vmatpush.bf16.msra.mxu0 %v1361
        %1376 = vmatmul.bf16.gmra.mxu0 %v1366
        %v1377 = vpop.f32.mrf.mxu0
        %v1378 = vadd.f32 %v1351, %v1377
        %v1379 = vpop.f32.mrf.mxu0
        %v1380 = vadd.f32 %v1351, %v1379
        %1381 = vdwg.mxu0
        %v1382 = vmul.f32 %v1378, 0.5
        %v1383 = vmul.f32 %v1380, 0.5
        %v1384 = vmul.f32 %v1378, 0.044715
        %v1385 = vmul.f32 %v1380, 0.044715
        %v1386 = vmul.f32 %v1384, %v1378
        %v1387 = vmul.f32 %v1385, %v1380
        %v1388 = vmul.f32 %v1386, %v1378
        %v1389 = vmul.f32 %v1387, %v1380
        %v1390 = vadd.f32 %v1378, %v1388
        %v1391 = vadd.f32 %v1380, %v1389
        %v1392 = vmul.f32 %v1390, 0.7978846
        %v1393 = vmul.f32 %v1391, 0.7978846
        %v1394 = vtanh.pop %v1392
        %v1395 = vtanh.pop %v1393
        %v1396 = vadd.f32 %v1394, 1.0
        %v1397 = vadd.f32 %v1395, 1.0
        %v1398 = vmul.f32 %v1382, %v1396
        %v1399 = vmul.f32 %v1383, %v1397
        %v1400 = vpack.c.bf16 %v1399, %v1398
        %v1401 = vld [vmem:[%s647] sm:$0xf]
        %v1402 = vld [vmem:[%s647 + $0x4] sm:$0xf]
        %v1403 = vld [vmem:[%s647 + $0x8] sm:$0xf]
        %v1404 = vld [vmem:[%s647 + $0xc] sm:$0xf]
        %v1405 = vld [vmem:[%s647 + $0x10] sm:$0xf]
        %v1406 = vld [vmem:[%s647 + $0x14] sm:$0xf]
        %v1407 = vld [vmem:[%s647 + $0x18] sm:$0xf]
        %v1408 = vld [vmem:[%s647 + $0x1c] sm:$0xf]
        %v1409 = vld [vmem:[%s647 + $0x20] sm:$0xf]
        %v1410 = vld [vmem:[%s647 + $0x24] sm:$0xf]
        %v1411 = vld [vmem:[%s647 + $0x28] sm:$0xf]
        %v1412 = vld [vmem:[%s647 + $0x2c] sm:$0xf]
        %v1413 = vld [vmem:[%s647 + $0x30] sm:$0xf]
        %v1414 = vld [vmem:[%s647 + $0x34] sm:$0xf]
        %v1415 = vld [vmem:[%s647 + $0x38] sm:$0xf]
        %v1416 = vld [vmem:[%s647 + $0x3c] sm:$0xf]
        %v1417 = vld [vmem:[%s650] sm:$0x1]
        %v1419 = vperm.slane %v1417, 0
        %v1437 = vunpack.c.l.b16 %v1401
        %v1438 = vunpack.c.l.b16 %v1402
        %v1439 = vunpack.c.l.b16 %v1403
        %v1440 = vunpack.c.l.b16 %v1404
        %v1441 = vunpack.c.l.b16 %v1405
        %v1442 = vunpack.c.l.b16 %v1406
        %v1443 = vunpack.c.l.b16 %v1407
        %v1444 = vunpack.c.l.b16 %v1408
        %v1445 = vunpack.c.l.b16 %v1409
        %v1446 = vunpack.c.l.b16 %v1410
        %v1447 = vunpack.c.l.b16 %v1411
        %v1448 = vunpack.c.l.b16 %v1412
        %v1449 = vunpack.c.l.b16 %v1413
        %v1450 = vunpack.c.l.b16 %v1414
        %v1451 = vunpack.c.l.b16 %v1415
        %v1452 = vunpack.c.l.b16 %v1416
        %v1453 = vpack.c.b16 %v1438, %v1437
        %v1454 = vpack.c.b16 %v1440, %v1439
        %v1455 = vpack.c.b16 %v1442, %v1441
        %v1456 = vpack.c.b16 %v1444, %v1443
        %v1457 = vpack.c.b16 %v1446, %v1445
        %v1458 = vpack.c.b16 %v1448, %v1447
        %v1459 = vpack.c.b16 %v1450, %v1449
        %v1460 = vpack.c.b16 %v1452, %v1451
        %1469 = vmatpush.bf16.msra.mxu0 %v1460
        %1470 = vmatpush.bf16.msra.mxu0 %v1459
        %1471 = vmatpush.bf16.msra.mxu0 %v1458
        %1472 = vmatpush.bf16.msra.mxu0 %v1457
        %1473 = vmatpush.bf16.msra.mxu0 %v1456
        %1474 = vmatpush.bf16.msra.mxu0 %v1455
        %1475 = vmatpush.bf16.msra.mxu0 %v1454
        %1476 = vmatpush.bf16.msra.mxu0 %v1453
        %1477 = vmatmul.bf16.gmra.mxu0 %v1400
        %v1478 = vpop.f32.mrf.mxu0
        %v1479 = vadd.f32 %v1419, %v1478
        %v1480 = vpop.f32.mrf.mxu0
        %v1481 = vadd.f32 %v1419, %v1480
        %1482 = vdwg.mxu0
        %v1483 = vadd.f32 %v1286, %v1479
        %v1484 = vadd.f32 %v1287, %v1481
        %p1485 = scmp.lt.s32.totalorder %s31, 1
        // Predicated region
        $region81: #{tpu_custom_call.1} parent=75 // pred_check
          %p1486 = pneg %p1485
        $region82: #{tpu_custom_call.1} parent=75 // pred_check_branch
          %1488 = sbr.rel (%p1486) target = $region84
        $region83: #{tpu_custom_call.1} parent=75 // pred_region
          %1489 = vst.msk [vmem:[#allocation2] sm:$0xff] %vm666, %v1483
          %1490 = vst.msk [vmem:[#allocation2 + $0x8] sm:$0xff] %vm666, %v1484
        $region84: #{tpu_custom_call.1} parent=75 // pred_fallthru
          _
        %p1491 = scmp.eq.s32.totalorder %s31, 1
        // Predicated region
        $region85: #{tpu_custom_call.1} parent=75 // pred_check
          %p1492 = pneg %p1491
        $region86: #{tpu_custom_call.1} parent=75 // pred_check_branch
          %1494 = sbr.rel (%p1492) target = $region88
        $region87: #{tpu_custom_call.1} parent=75 // pred_region
          %v1495 = vld [vmem:[%s12] sm:$0x1]
          %v1496 = vld [vmem:[%s13] sm:$0x1]
          %v1497 = vsel %vm666, %v1483, 0.0
          %1498 = vadd.xlane.f32.xlu0 %v1497
          %v1499 = vpop.xlane.xlu0 %1498
          %v1500 = vsel %vm666, %v1484, 0.0
          %1501 = vadd.xlane.f32.xlu0 %v1500
          %v1502 = vpop.xlane.xlu0 %1501
          %v1503 = vmul.f32 %v1499, %v679
          %v1504 = vmul.f32 %v1502, %v679
          %v1505 = vsub.f32 %v1483, %v1503
          %v1506 = vsub.f32 %v1484, %v1504
          %v1507 = vmul.f32 %v1505, %v1505
          %v1508 = vmul.f32 %v1506, %v1506
          %v1509 = vsel %vm666, %v1507, 0.0
          %1510 = vadd.xlane.f32.xlu0 %v1509
          %v1511 = vpop.xlane.xlu0 %1510
          %v1512 = vsel %vm666, %v1508, 0.0
          %1513 = vadd.xlane.f32.xlu0 %v1512
          %v1514 = vpop.xlane.xlu0 %1513
          %v1515 = vmul.f32 %v1511, %v679
          %v1516 = vmul.f32 %v1514, %v679
          %v1517 = vadd.f32 %v1515, 1e-05
          %v1518 = vadd.f32 %v1516, 1e-05
          %v1519 = vrsqrt.pop %v1517
          %v1520 = vmul.f32 %v1519, %v1517
          %v1521 = vmul.f32 %v1520, %v1519
          %v1522 = vmul.f32 0.5, %v1521
          %v1523 = vsub.f32 1.5, %v1522
          %v1524 = vmul.f32 %v1519, %v1523
          %vm1525 = vweird.f32 %v1517
          %vm1526 = vweird.f32 %v1519
          %vm1527 = vmor %vm1525, %vm1526
          %v1528 = vsel %vm1527, %v1519, %v1524
          %v1529 = vrsqrt.pop %v1518
          %v1530 = vmul.f32 %v1529, %v1518
          %v1531 = vmul.f32 %v1530, %v1529
          %v1532 = vmul.f32 0.5, %v1531
          %v1533 = vsub.f32 1.5, %v1532
          %v1534 = vmul.f32 %v1529, %v1533
          %vm1535 = vweird.f32 %v1518
          %vm1536 = vweird.f32 %v1529
          %vm1537 = vmor %vm1535, %vm1536
          %v1538 = vsel %vm1537, %v1529, %v1534
          %v1539 = vmul.f32 %v1505, %v1528
          %v1540 = vmul.f32 %v1506, %v1538
          %v1542 = vperm.slane %v1495, 0
          %v1544 = vmul.f32 %v1539, %v1542
          %v1545 = vmul.f32 %v1540, %v1542
          %v1547 = vperm.slane %v1496, 0
          %v1549 = vadd.f32 %v1544, %v1547
          %v1550 = vadd.f32 %v1545, %v1547
          %1551 = vst.msk [vmem:[#allocation2] sm:$0xff] %vm666, %v1549
          %1552 = vst.msk [vmem:[#allocation2 + $0x8] sm:$0xff] %vm666, %v1550
        $region88: #{tpu_custom_call.1} parent=75 // pred_fallthru
          _
        // Predicated region
        $region89: #{tpu_custom_call.1} parent=75 // pred_check
          %p1553 = pneg %p410
        $region90: #{tpu_custom_call.1} parent=75 // pred_check_branch
          %1555 = sbr.rel (%p1553) target = $region92
        $region91: #{tpu_custom_call.1} parent=75 // pred_region
          %s1556 = smul.u32 2, %s30
          %1558 = vsyncadd [#allocation3], 0
          %s1559 = smul.addr %s1556, 8
          %s1560 = scalar_lea.hbm %s14, %s1559
          %s1561 = sshll.u32 [#allocation2], 4
          %s1562 = int_to_ptr.vmem [resolvable:$true] %s1561
          %s1563 = sshll.u32 %s1560, 4
          %s1564 = int_to_ptr.hbm [resolvable:$true] %s1563
          %1569 = dma.vmem_to_hbm [thread:$0]  %s1562, 256, %s1564, [#allocation3], 128, 128, 8
        $region92: #{tpu_custom_call.1} parent=75 // pred_fallthru
          _
        // Predicated region
        $region93: #{tpu_custom_call.1} parent=75 // pred_check
          %p1570 = pneg %p410
        $region94: #{tpu_custom_call.1} parent=75 // pred_check_branch
          %1572 = sbr.rel (%p1570) target = $region96
        $region95: #{tpu_custom_call.1} parent=75 // pred_region
          %1574 = dma.done [#allocation3], 256
        $region96: #{tpu_custom_call.1} parent=75 // pred_fallthru
          _
      $region76: #{tpu_custom_call.1} parent=5 // pred_fallthru
        _
      %p1575 = scmp.le.s32.totalorder 2, %s21
      // Predicated region
      $region97: #{tpu_custom_call.1} parent=5 // pred_check
        %p1576 = pneg %p1575
      $region98: #{tpu_custom_call.1} parent=5 // pred_check_branch
        %1578 = sbr.rel (%p1576) target = $region100
      $region99: #{tpu_custom_call.1} parent=5 // pred_region
        %s1579 = ssub.s32 %s21, 2
      $region100: #{tpu_custom_call.1} parent=5 // pred_fallthru
        _
    $region6: #{tpu_custom_call.1} parent=1 // loop_footer
      %s25 = sadd.s32 1, %s21
    $region7: #{tpu_custom_call.1} parent=1 // loop_footer_branch
      %20 = sbr.rel target = $region3
    $region8: #{tpu_custom_call.1} parent=1 // loop_exit
      _
    %1580 = vsyncpa [#allocation3], 1
    %s1581 = scalar_lea.sflag [#allocation3], 1
    %1582 = vsyncpa %s1581, 1

</llo_original>
